<compile_context>
chip_gen: v7x
topology: tpu7x:2x2x1
jax: 0.10.0
libtpu: 0.0.40
codegen_flags: <defaults>
</compile_context>

<pallas_src>
import functools

import numpy as np
import jax
import jax.numpy as jnp
from jax.experimental import pallas as pl
from jax.experimental.pallas import tpu as pltpu

LN_EPS = 1e-5  # nn.LayerNorm default


def _round_up(x, m):
    return ((x + m - 1) // m) * m


# ---------------------------------------------------------------------------
# Kernel
# ---------------------------------------------------------------------------
def _fcblock_kernel(out_dims, outermost_linear, f_out,
                    x_ref, w0_ref, w_ref, g_ref, b_ref, o_ref):
    """Push one lane-dense (feature, TM) tile of points through the FC stack.

      x_ref  : (FI, TM)   bf16  input tile; rows 0..f_in-1 = features, last row = 1
      w0_ref : (DA, FI)   bf16  layer-0 [W | b] plus W.mean(0)/mean(b) row at DA-1
      w_ref  : (L-1, DA, DA) bf16  remaining layers, same augmented layout
      g_ref  : (L, DA, 1) f32   LayerNorm gamma (0 on pad + aug rows)
      b_ref  : (L, DA, 1) f32   LayerNorm beta  (1 on the aug row -> regenerates ones)
      o_ref  : (f_out, TM) f32  output tile
    """
    n_layers = len(out_dims)
    aug = w0_ref.shape[0] - 1                       # augmented (ones / mean) row index
    cur = x_ref[...]                                # (FI, TM) bf16

    for l in range(n_layers):
        w = w0_ref[...] if l == 0 else w_ref[l - 1]
        # Linear (+ bias via the ones row) and the LN mean (via the W.mean(0)
        # row) in ONE bf16 MXU matmul with f32 accumulation.
        h = jnp.dot(w, cur, preferred_element_type=jnp.float32)   # (DA, TM) f32

        is_last = l == n_layers - 1
        if not (is_last and outermost_linear):
            inv_n = 1.0 / float(out_dims[l])
            mean = h[aug:aug + 1, :]                               # (1, TM), from MXU
            msq = mean * mean
            # Pad rows of h are exactly 0; subtract the aug row's mean^2 so the
            # sum only covers the real features.
            ex2 = (jnp.sum(h * h, axis=0, keepdims=True) - msq) * inv_n
            var = ex2 - msq
            h = (h - mean) * jax.lax.rsqrt(var + LN_EPS)           # f32 elementwise
            h = h * g_ref[l] + b_ref[l]        # pad rows -> 0, aug row -> 1
            h = jnp.maximum(h, 0.0)            # ReLU (keeps pad=0, aug=1)

        if is_last:
            o_ref[...] = h[:f_out, :]          # lane-dense unmasked store
        else:
            cur = h.astype(jnp.bfloat16)       # bf16 operands for the next MXU pass


# ---------------------------------------------------------------------------
# Parameter packing (hoisted out of the forward; runs once, host side)
# ---------------------------------------------------------------------------
def pack_fcblock_params(params, *, outermost_linear=False):
    Ws = [np.asarray(w, np.float32) for w in params["W"]]
    bs = [np.asarray(b, np.float32) for b in params["b"]]
    gammas, betas = params["gamma"], params["beta"]

    L = len(Ws)
    out_dims = tuple(int(w.shape[0]) for w in Ws)
    in_dims = tuple(int(w.shape[1]) for w in Ws)
    f_in, f_out = in_dims[0], out_dims[-1]

    DA = _round_up(max(out_dims) + 1, 16)      # padded feature-slab height (+aug row)
    AUG = DA - 1
    FI = f_in + 1                              # input features + ones row

    w0 = np.zeros((DA, FI), np.float32)
    w0[:out_dims[0], :f_in] = Ws[0]
    w0[:out_dims[0], f_in] = bs[0]
    w0[AUG, :f_in] = Ws[0].mean(axis=0)        # emits LN mean row for free
    w0[AUG, f_in] = bs[0].mean()

    w_rest = np.zeros((L - 1, DA, DA), np.float32)
    for l in range(1, L):
        o, i = out_dims[l], in_dims[l]
        w_rest[l - 1, :o, :i] = Ws[l]
        w_rest[l - 1, :o, AUG] = bs[l]         # bias folded into the matmul
        w_rest[l - 1, AUG, :i] = Ws[l].mean(axis=0)
        w_rest[l - 1, AUG, AUG] = bs[l].mean()

    g = np.zeros((L, DA, 1), np.float32)
    bta = np.zeros((L, DA, 1), np.float32)
    for l in range(L):
        if gammas[l] is not None:
            g[l, :out_dims[l], 0] = np.asarray(gammas[l], np.float32)
            bta[l, :out_dims[l], 0] = np.asarray(betas[l], np.float32)
            bta[l, AUG, 0] = 1.0               # LN restores the ones row

    return dict(
        w0=jnp.asarray(w0, jnp.bfloat16),
        w=jnp.asarray(w_rest, jnp.bfloat16),
        gamma=jnp.asarray(g, jnp.float32),
        beta=jnp.asarray(bta, jnp.float32),
        out_dims=out_dims, f_in=f_in, f_out=f_out,
        outermost_linear=bool(outermost_linear),
    )


# ---------------------------------------------------------------------------
# Forward (fully jitted so the transpose / pad / ones-row glue fuses)
# ---------------------------------------------------------------------------
def _pick_tile(m, tile_m):
    tm = _round_up(max(int(tile_m), 128), 128)     # enforce multiple of 128
    m128 = _round_up(m, 128)
    tm = min(tm, m128)
    # Keep grid >= 2 when there is enough work so both v7x TensorCores are busy
    # under dimension_semantics=("parallel",); neutral on v5e/v6e.
    if m128 >= 256:
        tm = min(tm, _round_up((m + 1) // 2, 128))
    m_pad = _round_up(m, tm)
    return tm, m_pad


@functools.partial(jax.jit,
                   static_argnames=("out_dims", "f_in", "f_out",
                                    "outermost_linear", "tile_m"))
def _fcblock_forward(x, w0, w_rest, gamma, beta, *, out_dims, f_in, f_out,
                     outermost_linear, tile_m):
    lead = x.shape[:-1]
    m = int(np.prod(lead)) if lead else 1
    DA, FI = w0.shape
    L = len(out_dims)
    tm, m_pad = _pick_tile(m, tile_m)

    # Channel-first, lane-dense layout + ones row (bias fold); fuses under jit.
    xt = x.reshape(m, f_in).astype(jnp.bfloat16).T                   # (f_in, M)
    xt = jnp.concatenate([xt, jnp.ones((1, m), jnp.bfloat16)], axis=0)  # (FI, M)
    if m_pad != m:
        xt = jnp.pad(xt, ((0, 0), (0, m_pad - m)))

    kernel = functools.partial(_fcblock_kernel, out_dims, outermost_linear, f_out)
    out_t = pl.pallas_call(
        kernel,
        out_shape=jax.ShapeDtypeStruct((f_out, m_pad), jnp.float32),
        grid=(m_pad // tm,),
        in_specs=[
            pl.BlockSpec((FI, tm), lambda i: (0, i)),             # point tile
            pl.BlockSpec((DA, FI), lambda i: (0, 0)),             # layer-0 weights
            pl.BlockSpec((L - 1, DA, DA), lambda i: (0, 0, 0)),   # remaining weights
            pl.BlockSpec((L, DA, 1), lambda i: (0, 0, 0)),        # gamma
            pl.BlockSpec((L, DA, 1), lambda i: (0, 0, 0)),        # beta
        ],
        out_specs=pl.BlockSpec((f_out, tm), lambda i: (0, i)),
        compiler_params=pltpu.CompilerParams(
            dimension_semantics=("parallel",)),
    )(xt, w0, w_rest, gamma, beta)

    return out_t[:, :m].T.reshape(lead + (f_out,))


def fcblock_forward(x, packed, *, tile_m=1024):
    """Pallas forward of FCBlock. x: (..., in_features) -> (..., out_features)."""
    return _fcblock_forward(
        x, packed["w0"], packed["w"], packed["gamma"], packed["beta"],
        out_dims=packed["out_dims"], f_in=packed["f_in"], f_out=packed["f_out"],
        outermost_linear=packed["outermost_linear"], tile_m=tile_m)


# ---------------------------------------------------------------------------
# Pure-JAX reference + init (matches PyTorch FCBlock)
# ---------------------------------------------------------------------------
def fcblock_reference(x, params, *, outermost_linear=False):
    Ws, bs, gammas, betas = params["W"], params["b"], params["gamma"], params["beta"]
    h = x.astype(jnp.float32)
    n_layers = len(Ws)
    for l in range(n_layers):
        h = jnp.einsum("...i,oi->...o", h, Ws[l],
                       precision=jax.lax.Precision.HIGHEST) + bs[l]
        if not (l == n_layers - 1 and outermost_linear):
            mean = jnp.mean(h, axis=-1, keepdims=True)
            var = jnp.mean((h - mean) ** 2, axis=-1, keepdims=True)
            h = (h - mean) * jax.lax.rsqrt(var + LN_EPS) * gammas[l] + betas[l]
            h = jnp.maximum(h, 0.0)
    return h


def init_fcblock_params(key, in_features, hidden_ch, num_hidden_layers,
                        out_features, outermost_linear=False):
    """kaiming-normal(relu, fan_in) weights, default nn.Linear uniform bias,
    LayerNorm gamma=1 / beta=0 (matches FCBlock.init_weights)."""
    dims = [(hidden_ch, in_features)]
    dims += [(hidden_ch, hidden_ch)] * num_hidden_layers
    dims += [(out_features, hidden_ch)]
    Ws, bs, gammas, betas = [], [], [], []
    keys = jax.random.split(key, 2 * len(dims))
    for l, (o, i) in enumerate(dims):
        w = jax.random.normal(keys[2 * l], (o, i), jnp.float32) * np.sqrt(2.0 / i)
        bound = 1.0 / np.sqrt(i)
        b = jax.random.uniform(keys[2 * l + 1], (o,), jnp.float32, -bound, bound)
        Ws.append(w)
        bs.append(b)
        if l == len(dims) - 1 and outermost_linear:
            gammas.append(None)
            betas.append(None)
        else:
            gammas.append(jnp.ones((o,), jnp.float32))
            betas.append(jnp.zeros((o,), jnp.float32))
    return dict(W=Ws, b=bs, gamma=gammas, beta=betas)


if __name__ == "__main__":
    key = jax.random.PRNGKey(0)
    k_x, k_p1, k_p2 = jax.random.split(key, 3)

    B, N = 2, 256              # 2 batches x (16*16) points
    in_features = 3
    hidden_ch = 32
    num_hidden_layers = 2
    out_features = 4

    x = jax.random.normal(k_x, (B, N, in_features), jnp.float32)

    # Config 1: module default (outermost_linear=False -> last layer is FCLayer)
    params_a = init_fcblock_params(k_p1, in_features, hidden_ch,
                                   num_hidden_layers, out_features,
                                   outermost_linear=False)
    packed_a = pack_fcblock_params(params_a, outermost_linear=False)
    out_a = fcblock_forward(x, packed_a, tile_m=1024)
    ref_a = fcblock_reference(x, params_a, outermost_linear=False)

    # Config 2: outermost_linear=True (last layer plain Linear)
    params_b = init_fcblock_params(k_p2, in_features, hidden_ch,
                                   num_hidden_layers, out_features,
                                   outermost_linear=True)
    packed_b = pack_fcblock_params(params_b, outermost_linear=True)
    out_b = fcblock_forward(x, packed_b, tile_m=1024)
    ref_b = fcblock_reference(x, params_b, outermost_linear=True)

    jax.block_until_ready((out_a, out_b))

    assert out_a.shape == (B, N, out_features)
    assert out_b.shape == (B, N, out_features)
    assert bool(jnp.all(jnp.isfinite(out_a))) and bool(jnp.all(jnp.isfinite(out_b)))
    # bf16 MXU operands -> compare at 2e-2 (accumulation stays f32).
    np.testing.assert_allclose(np.asarray(out_a), np.asarray(ref_a), rtol=2e-2, atol=2e-2)
    np.testing.assert_allclose(np.asarray(out_b), np.asarray(ref_b), rtol=2e-2, atol=2e-2)
    print("KERNEL_OK")
</pallas_src>

<mosaic_0001>
module attributes {stable_mosaic.version = 11 : i64} {
  func.func @_fcblock_kernel(%arg0: i32, %arg1: memref<4x256xbf16, #tpu.memory_space<vmem>>, %arg2: memref<48x4xbf16, #tpu.memory_space<vmem>>, %arg3: memref<3x48x48xbf16, #tpu.memory_space<vmem>>, %arg4: memref<4x48x1xf32, #tpu.memory_space<vmem>>, %arg5: memref<4x48x1xf32, #tpu.memory_space<vmem>>, %arg6: memref<4x256xf32, #tpu.memory_space<vmem>>) attributes {dimension_semantics = [#tpu.dimension_semantics<parallel>], iteration_bounds = array<i64: 2>, scalar_prefetch = 0 : i64, scratch_operands = 0 : i64, tpu.core_type = #tpu.core_type<tc>, window_params = [{transform_indices = @transform_0, window_bounds = array<i64: 4, 256>}, {pipeline_mode = #tpu.pipeline_mode<synchronous>, transform_indices = @transform_1, window_bounds = array<i64: 48, 4>}, {pipeline_mode = #tpu.pipeline_mode<synchronous>, transform_indices = @transform_2, window_bounds = array<i64: 3, 48, 48>}, {pipeline_mode = #tpu.pipeline_mode<synchronous>, transform_indices = @transform_3, window_bounds = array<i64: 4, 48, 1>}, {pipeline_mode = #tpu.pipeline_mode<synchronous>, transform_indices = @transform_4, window_bounds = array<i64: 4, 48, 1>}, {transform_indices = @transform_5, window_bounds = array<i64: 4, 256>}]} {
    %c0 = arith.constant 0 : index
    %c0_0 = arith.constant 0 : index
    %0 = vector.load %arg1[%c0, %c0_0] : memref<4x256xbf16, #tpu.memory_space<vmem>>, vector<4x256xbf16>
    %c0_1 = arith.constant 0 : index
    %c0_2 = arith.constant 0 : index
    %1 = vector.load %arg2[%c0_1, %c0_2] : memref<48x4xbf16, #tpu.memory_space<vmem>>, vector<48x4xbf16>
    %cst = arith.constant dense<0.000000e+00> : vector<48x256xf32>
    %2 = tpu.matmul %1, %0, %cst {dimension_numbers = #tpu.dot_dimension_numbers<[1], [0], [0], [1], [0, 0, 1, 1], [], []>} : vector<48x4xbf16>, vector<4x256xbf16>, vector<48x256xf32> -> vector<48x256xf32>
    %3 = vector.extract_strided_slice %2 {offsets = [47, 0], sizes = [1, 256], strides = [1, 1]} : vector<48x256xf32> to vector<1x256xf32>
    %4 = arith.mulf %3, %3 : vector<1x256xf32>
    %5 = arith.mulf %2, %2 : vector<48x256xf32>
    %cst_3 = arith.constant dense<0.000000e+00> : vector<256xf32>
    %6 = vector.multi_reduction <add>, %5, %cst_3 [0] : vector<48x256xf32> to vector<256xf32>
    %7 = vector.shape_cast %6 : vector<256xf32> to vector<1x256xf32>
    %8 = arith.subf %7, %4 : vector<1x256xf32>
    %cst_4 = arith.constant 3.125000e-02 : f32
    %9 = vector.broadcast %cst_4 : f32 to vector<1x256xf32>
    %10 = arith.mulf %8, %9 : vector<1x256xf32>
    %11 = arith.subf %10, %4 : vector<1x256xf32>
    %12 = vector.broadcast %3 : vector<1x256xf32> to vector<48x256xf32>
    %13 = arith.subf %2, %12 : vector<48x256xf32>
    %cst_5 = arith.constant 9.99999974E-6 : f32
    %14 = vector.broadcast %cst_5 : f32 to vector<1x256xf32>
    %15 = arith.addf %11, %14 : vector<1x256xf32>
    %16 = math.rsqrt %15 : vector<1x256xf32>
    %17 = vector.broadcast %16 : vector<1x256xf32> to vector<48x256xf32>
    %18 = arith.mulf %13, %17 : vector<48x256xf32>
    %c0_6 = arith.constant 0 : index
    %c0_7 = arith.constant 0 : index
    %c0_8 = arith.constant 0 : index
    %19 = vector.load %arg4[%c0_6, %c0_7, %c0_8] : memref<4x48x1xf32, #tpu.memory_space<vmem>>, vector<1x48x1xf32>
    %20 = vector.shape_cast %19 : vector<1x48x1xf32> to vector<48x1xf32>
    %21 = vector.broadcast %20 : vector<48x1xf32> to vector<48x256xf32>
    %22 = arith.mulf %18, %21 : vector<48x256xf32>
    %c0_9 = arith.constant 0 : index
    %c0_10 = arith.constant 0 : index
    %c0_11 = arith.constant 0 : index
    %23 = vector.load %arg5[%c0_9, %c0_10, %c0_11] : memref<4x48x1xf32, #tpu.memory_space<vmem>>, vector<1x48x1xf32>
    %24 = vector.shape_cast %23 : vector<1x48x1xf32> to vector<48x1xf32>
    %25 = vector.broadcast %24 : vector<48x1xf32> to vector<48x256xf32>
    %26 = arith.addf %22, %25 : vector<48x256xf32>
    %cst_12 = arith.constant 0.000000e+00 : f32
    %27 = vector.broadcast %cst_12 : f32 to vector<48x256xf32>
    %28 = arith.maximumf %26, %27 : vector<48x256xf32>
    %29 = arith.truncf %28 : vector<48x256xf32> to vector<48x256xbf16>
    %c0_13 = arith.constant 0 : index
    %c0_14 = arith.constant 0 : index
    %c0_15 = arith.constant 0 : index
    %30 = vector.load %arg3[%c0_13, %c0_14, %c0_15] : memref<3x48x48xbf16, #tpu.memory_space<vmem>>, vector<1x48x48xbf16>
    %31 = vector.shape_cast %30 : vector<1x48x48xbf16> to vector<48x48xbf16>
    %cst_16 = arith.constant dense<0.000000e+00> : vector<48x256xf32>
    %32 = tpu.matmul %31, %29, %cst_16 {dimension_numbers = #tpu.dot_dimension_numbers<[1], [0], [0], [1], [0, 0, 1, 1], [], []>} : vector<48x48xbf16>, vector<48x256xbf16>, vector<48x256xf32> -> vector<48x256xf32>
    %33 = vector.extract_strided_slice %32 {offsets = [47, 0], sizes = [1, 256], strides = [1, 1]} : vector<48x256xf32> to vector<1x256xf32>
    %34 = arith.mulf %33, %33 : vector<1x256xf32>
    %35 = arith.mulf %32, %32 : vector<48x256xf32>
    %cst_17 = arith.constant dense<0.000000e+00> : vector<256xf32>
    %36 = vector.multi_reduction <add>, %35, %cst_17 [0] : vector<48x256xf32> to vector<256xf32>
    %37 = vector.shape_cast %36 : vector<256xf32> to vector<1x256xf32>
    %38 = arith.subf %37, %34 : vector<1x256xf32>
    %cst_18 = arith.constant 3.125000e-02 : f32
    %39 = vector.broadcast %cst_18 : f32 to vector<1x256xf32>
    %40 = arith.mulf %38, %39 : vector<1x256xf32>
    %41 = arith.subf %40, %34 : vector<1x256xf32>
    %42 = vector.broadcast %33 : vector<1x256xf32> to vector<48x256xf32>
    %43 = arith.subf %32, %42 : vector<48x256xf32>
    %cst_19 = arith.constant 9.99999974E-6 : f32
    %44 = vector.broadcast %cst_19 : f32 to vector<1x256xf32>
    %45 = arith.addf %41, %44 : vector<1x256xf32>
    %46 = math.rsqrt %45 : vector<1x256xf32>
    %47 = vector.broadcast %46 : vector<1x256xf32> to vector<48x256xf32>
    %48 = arith.mulf %43, %47 : vector<48x256xf32>
    %c1 = arith.constant 1 : index
    %c0_20 = arith.constant 0 : index
    %c0_21 = arith.constant 0 : index
    %49 = vector.load %arg4[%c1, %c0_20, %c0_21] : memref<4x48x1xf32, #tpu.memory_space<vmem>>, vector<1x48x1xf32>
    %50 = vector.shape_cast %49 : vector<1x48x1xf32> to vector<48x1xf32>
    %51 = vector.broadcast %50 : vector<48x1xf32> to vector<48x256xf32>
    %52 = arith.mulf %48, %51 : vector<48x256xf32>
    %c1_22 = arith.constant 1 : index
    %c0_23 = arith.constant 0 : index
    %c0_24 = arith.constant 0 : index
    %53 = vector.load %arg5[%c1_22, %c0_23, %c0_24] : memref<4x48x1xf32, #tpu.memory_space<vmem>>, vector<1x48x1xf32>
    %54 = vector.shape_cast %53 : vector<1x48x1xf32> to vector<48x1xf32>
    %55 = vector.broadcast %54 : vector<48x1xf32> to vector<48x256xf32>
    %56 = arith.addf %52, %55 : vector<48x256xf32>
    %cst_25 = arith.constant 0.000000e+00 : f32
    %57 = vector.broadcast %cst_25 : f32 to vector<48x256xf32>
    %58 = arith.maximumf %56, %57 : vector<48x256xf32>
    %59 = arith.truncf %58 : vector<48x256xf32> to vector<48x256xbf16>
    %c1_26 = arith.constant 1 : index
    %c0_27 = arith.constant 0 : index
    %c0_28 = arith.constant 0 : index
    %60 = vector.load %arg3[%c1_26, %c0_27, %c0_28] : memref<3x48x48xbf16, #tpu.memory_space<vmem>>, vector<1x48x48xbf16>
    %61 = vector.shape_cast %60 : vector<1x48x48xbf16> to vector<48x48xbf16>
    %cst_29 = arith.constant dense<0.000000e+00> : vector<48x256xf32>
    %62 = tpu.matmul %61, %59, %cst_29 {dimension_numbers = #tpu.dot_dimension_numbers<[1], [0], [0], [1], [0, 0, 1, 1], [], []>} : vector<48x48xbf16>, vector<48x256xbf16>, vector<48x256xf32> -> vector<48x256xf32>
    %63 = vector.extract_strided_slice %62 {offsets = [47, 0], sizes = [1, 256], strides = [1, 1]} : vector<48x256xf32> to vector<1x256xf32>
    %64 = arith.mulf %63, %63 : vector<1x256xf32>
    %65 = arith.mulf %62, %62 : vector<48x256xf32>
    %cst_30 = arith.constant dense<0.000000e+00> : vector<256xf32>
    %66 = vector.multi_reduction <add>, %65, %cst_30 [0] : vector<48x256xf32> to vector<256xf32>
    %67 = vector.shape_cast %66 : vector<256xf32> to vector<1x256xf32>
    %68 = arith.subf %67, %64 : vector<1x256xf32>
    %cst_31 = arith.constant 3.125000e-02 : f32
    %69 = vector.broadcast %cst_31 : f32 to vector<1x256xf32>
    %70 = arith.mulf %68, %69 : vector<1x256xf32>
    %71 = arith.subf %70, %64 : vector<1x256xf32>
    %72 = vector.broadcast %63 : vector<1x256xf32> to vector<48x256xf32>
    %73 = arith.subf %62, %72 : vector<48x256xf32>
    %cst_32 = arith.constant 9.99999974E-6 : f32
    %74 = vector.broadcast %cst_32 : f32 to vector<1x256xf32>
    %75 = arith.addf %71, %74 : vector<1x256xf32>
    %76 = math.rsqrt %75 : vector<1x256xf32>
    %77 = vector.broadcast %76 : vector<1x256xf32> to vector<48x256xf32>
    %78 = arith.mulf %73, %77 : vector<48x256xf32>
    %c2 = arith.constant 2 : index
    %c0_33 = arith.constant 0 : index
    %c0_34 = arith.constant 0 : index
    %79 = vector.load %arg4[%c2, %c0_33, %c0_34] : memref<4x48x1xf32, #tpu.memory_space<vmem>>, vector<1x48x1xf32>
    %80 = vector.shape_cast %79 : vector<1x48x1xf32> to vector<48x1xf32>
    %81 = vector.broadcast %80 : vector<48x1xf32> to vector<48x256xf32>
    %82 = arith.mulf %78, %81 : vector<48x256xf32>
    %c2_35 = arith.constant 2 : index
    %c0_36 = arith.constant 0 : index
    %c0_37 = arith.constant 0 : index
    %83 = vector.load %arg5[%c2_35, %c0_36, %c0_37] : memref<4x48x1xf32, #tpu.memory_space<vmem>>, vector<1x48x1xf32>
    %84 = vector.shape_cast %83 : vector<1x48x1xf32> to vector<48x1xf32>
    %85 = vector.broadcast %84 : vector<48x1xf32> to vector<48x256xf32>
    %86 = arith.addf %82, %85 : vector<48x256xf32>
    %cst_38 = arith.constant 0.000000e+00 : f32
    %87 = vector.broadcast %cst_38 : f32 to vector<48x256xf32>
    %88 = arith.maximumf %86, %87 : vector<48x256xf32>
    %89 = arith.truncf %88 : vector<48x256xf32> to vector<48x256xbf16>
    %c2_39 = arith.constant 2 : index
    %c0_40 = arith.constant 0 : index
    %c0_41 = arith.constant 0 : index
    %90 = vector.load %arg3[%c2_39, %c0_40, %c0_41] : memref<3x48x48xbf16, #tpu.memory_space<vmem>>, vector<1x48x48xbf16>
    %91 = vector.shape_cast %90 : vector<1x48x48xbf16> to vector<48x48xbf16>
    %cst_42 = arith.constant dense<0.000000e+00> : vector<48x256xf32>
    %92 = tpu.matmul %91, %89, %cst_42 {dimension_numbers = #tpu.dot_dimension_numbers<[1], [0], [0], [1], [0, 0, 1, 1], [], []>} : vector<48x48xbf16>, vector<48x256xbf16>, vector<48x256xf32> -> vector<48x256xf32>
    %93 = vector.extract_strided_slice %92 {offsets = [47, 0], sizes = [1, 256], strides = [1, 1]} : vector<48x256xf32> to vector<1x256xf32>
    %94 = arith.mulf %93, %93 : vector<1x256xf32>
    %95 = arith.mulf %92, %92 : vector<48x256xf32>
    %cst_43 = arith.constant dense<0.000000e+00> : vector<256xf32>
    %96 = vector.multi_reduction <add>, %95, %cst_43 [0] : vector<48x256xf32> to vector<256xf32>
    %97 = vector.shape_cast %96 : vector<256xf32> to vector<1x256xf32>
    %98 = arith.subf %97, %94 : vector<1x256xf32>
    %cst_44 = arith.constant 2.500000e-01 : f32
    %99 = vector.broadcast %cst_44 : f32 to vector<1x256xf32>
    %100 = arith.mulf %98, %99 : vector<1x256xf32>
    %101 = arith.subf %100, %94 : vector<1x256xf32>
    %102 = vector.broadcast %93 : vector<1x256xf32> to vector<48x256xf32>
    %103 = arith.subf %92, %102 : vector<48x256xf32>
    %cst_45 = arith.constant 9.99999974E-6 : f32
    %104 = vector.broadcast %cst_45 : f32 to vector<1x256xf32>
    %105 = arith.addf %101, %104 : vector<1x256xf32>
    %106 = math.rsqrt %105 : vector<1x256xf32>
    %107 = vector.broadcast %106 : vector<1x256xf32> to vector<48x256xf32>
    %108 = arith.mulf %103, %107 : vector<48x256xf32>
    %c3 = arith.constant 3 : index
    %c0_46 = arith.constant 0 : index
    %c0_47 = arith.constant 0 : index
    %109 = vector.load %arg4[%c3, %c0_46, %c0_47] : memref<4x48x1xf32, #tpu.memory_space<vmem>>, vector<1x48x1xf32>
    %110 = vector.shape_cast %109 : vector<1x48x1xf32> to vector<48x1xf32>
    %111 = vector.broadcast %110 : vector<48x1xf32> to vector<48x256xf32>
    %112 = arith.mulf %108, %111 : vector<48x256xf32>
    %c3_48 = arith.constant 3 : index
    %c0_49 = arith.constant 0 : index
    %c0_50 = arith.constant 0 : index
    %113 = vector.load %arg5[%c3_48, %c0_49, %c0_50] : memref<4x48x1xf32, #tpu.memory_space<vmem>>, vector<1x48x1xf32>
    %114 = vector.shape_cast %113 : vector<1x48x1xf32> to vector<48x1xf32>
    %115 = vector.broadcast %114 : vector<48x1xf32> to vector<48x256xf32>
    %116 = arith.addf %112, %115 : vector<48x256xf32>
    %cst_51 = arith.constant 0.000000e+00 : f32
    %117 = vector.broadcast %cst_51 : f32 to vector<48x256xf32>
    %118 = arith.maximumf %116, %117 : vector<48x256xf32>
    %119 = vector.extract_strided_slice %118 {offsets = [0, 0], sizes = [4, 256], strides = [1, 1]} : vector<48x256xf32> to vector<4x256xf32>
    %c0_52 = arith.constant 0 : index
    %c0_53 = arith.constant 0 : index
    %120 = vector.load %arg6[%c0_52, %c0_53] : memref<4x256xf32, #tpu.memory_space<vmem>>, vector<4x256xf32>
    tpu.vector_store %arg6[%c0_52, %c0_53], %119 {strides = array<i32>} : memref<4x256xf32, #tpu.memory_space<vmem>>, vector<4x256xf32>,
    return
  }
  func.func @transform_0(%arg0: i32) -> (i32, i32) {
    %c0_i32 = arith.constant 0 : i32
    %c0_i32_0 = arith.constant 0 : i32
    return %c0_i32, %arg0 : i32, i32
  }
  func.func @transform_1(%arg0: i32) -> (i32, i32) {
    %c0_i32 = arith.constant 0 : i32
    %c0_i32_0 = arith.constant 0 : i32
    %c0_i32_1 = arith.constant 0 : i32
    return %c0_i32, %c0_i32_0 : i32, i32
  }
  func.func @transform_2(%arg0: i32) -> (i32, i32, i32) {
    %c0_i32 = arith.constant 0 : i32
    %c0_i32_0 = arith.constant 0 : i32
    %c0_i32_1 = arith.constant 0 : i32
    %c0_i32_2 = arith.constant 0 : i32
    return %c0_i32, %c0_i32_0, %c0_i32_1 : i32, i32, i32
  }
  func.func @transform_3(%arg0: i32) -> (i32, i32, i32) {
    %c0_i32 = arith.constant 0 : i32
    %c0_i32_0 = arith.constant 0 : i32
    %c0_i32_1 = arith.constant 0 : i32
    %c0_i32_2 = arith.constant 0 : i32
    return %c0_i32, %c0_i32_0, %c0_i32_1 : i32, i32, i32
  }
  func.func @transform_4(%arg0: i32) -> (i32, i32, i32) {
    %c0_i32 = arith.constant 0 : i32
    %c0_i32_0 = arith.constant 0 : i32
    %c0_i32_1 = arith.constant 0 : i32
    %c0_i32_2 = arith.constant 0 : i32
    return %c0_i32, %c0_i32_0, %c0_i32_1 : i32, i32, i32
  }
  func.func @transform_5(%arg0: i32) -> (i32, i32) {
    %c0_i32 = arith.constant 0 : i32
    %c0_i32_0 = arith.constant 0 : i32
    return %c0_i32, %arg0 : i32, i32
  }
}

</mosaic_0001>

<llo_original>
// kernel: _fcblock_forward.1
$region0: #{_fcblock_forward.1}
  #allocation0 [shape = 'u32[]', space=smem, size = 0x4, offset = 0x4, fixed_abs, tag = 'smem constant byte address 0x4 - core index']
  #allocation1 [shape = 'u32[144,128]{1,0:T(1,128)}', space=vmem, size = 0x12000, scoped, tag = 'internal scratch']
  %s0 = inlined_call_operand.vmem [shape: bf16[4,512], index: 0, kind: input, shape index: {}]
  %s1 = inlined_call_operand.vmem [shape: bf16[48,4], index: 1, kind: input, shape index: {}]
  %s2 = inlined_call_operand.vmem [shape: bf16[3,48,48], index: 2, kind: input, shape index: {}]
  %s3 = inlined_call_operand.vmem [shape: f32[4,48,1], index: 3, kind: input, shape index: {}]
  %s4 = inlined_call_operand.vmem [shape: f32[4,48,1], index: 4, kind: input, shape index: {}]
  %s5 = inlined_call_operand.hbm [shape: f32[4,512], index: 5, kind: output, shape index: {}]
  %s6 = sld [smem:[#allocation0]]
  $region53: #{_fcblock_forward.1} parent=0
    _
  %s8 = ssub.s32 1, %s6
  %s9 = scalar_select 0, %s8, %s6
  $region1: #{_fcblock_forward.1} parent=0
    #allocation2 [shape = 'u8[8192]{0}', space=vmem, size = 0x2000, scoped, tag = 'output window, operand 0']
    #allocation3 [shape = 's32[2]{0}', space=sflag, size = 0x8, scoped, tag = 'scoped memory for _fcblock_forward.1']
    %10 = vsyncpa [#allocation3], 0
    %s11 = scalar_lea.sflag [#allocation3], 1
    %12 = vsyncpa %s11, 0
    loop: start=0, step=1, limit=4
    $region2: #{_fcblock_forward.1} parent=1 // loop_pre_header
      _
    $region3: #{_fcblock_forward.1} parent=1 // loop_header
      %s14 = sphi 0, %s18
      %p15 = scmp.ge.s32.totalorder %s14, 4
      %s24 = sphi 0, %s26
      %s27 = sphi 0, %s24
      %s28 = sphi 0, %s27
      %s44 = sphi 0, %s28
      %s48 = sphi 0, %s48
      %s50 = sphi 0, %s48
      %s51 = sphi 0, %s50
      %s65 = sphi 0, %s51
      %s69 = sphi 0, %s69
      %s71 = sphi 0, %s69
      %s72 = sphi 0, %s71
      %s86 = sphi 0, %s72
      %s90 = sphi 0, %s90
      %s92 = sphi 0, %s90
      %s93 = sphi 0, %s92
      %s107 = sphi 0, %s93
      %s111 = sphi 0, %s111
      %s113 = sphi 0, %s111
      %s114 = sphi 0, %s113
      %s128 = sphi 0, %s114
      %s134 = sphi 0, %s136
      %s137 = sphi 0, %s134
      %s138 = sphi 0, %s137
      %s154 = sphi 0, %s138
    $region4: #{_fcblock_forward.1} parent=1 // loop_header_branch
      %17 = sbr.rel (%p15) target = $region8
    $region5: #{_fcblock_forward.1} parent=1 // loop_body
      %s19 = ssub.s32 %s14, 1
      %s20 = ssub.s32 %s14, 2
      %s21 = sadd.s32 %s14, 1
      %s22 = ssub.s32 %s14, %s21
      %p23 = scmp.eq.s32.totalorder %s22, 0
      %s25 = sadd.s32 %s24, 1
      %s26 = scalar_select %p23, %s24, %s25
      %p29 = pneg %p23
      %p30 = scmp.eq.s32.totalorder %s14, 1
      %p31 = por %p29, %p30
      %p32 = scmp.ne.s32.totalorder %s24, %s27
      %p33 = scmp.eq.s32.totalorder %s14, 0
      %p34 = por %p32, %p33
      %p35 = scmp.ne.s32.totalorder %s24, %s27
      %p36 = scmp.eq.s32.totalorder %s19, 1
      %p37 = por %p35, %p36
      %p38 = scmp.ne.s32.totalorder %s27, %s28
      %p39 = scmp.eq.s32.totalorder %s19, 0
      %p40 = por %p38, %p39
      %p41 = scmp.ne.s32.totalorder %s27, %s28
      %p42 = scmp.eq.s32.totalorder %s20, 1
      %p43 = por %p41, %p42
      %p45 = scmp.ne.s32.totalorder %s28, %s44
      %p46 = scmp.eq.s32.totalorder %s20, 0
      %p47 = por %p45, %p46
      %s49 = sadd.s32 %s48, 1
      %p52 = scmp.eq.s32.totalorder %s14, 1
      %p53 = scmp.ne.s32.totalorder %s48, %s50
      %p54 = scmp.eq.s32.totalorder %s14, 0
      %p55 = por %p53, %p54
      %p56 = scmp.ne.s32.totalorder %s48, %s50
      %p57 = scmp.eq.s32.totalorder %s19, 1
      %p58 = por %p56, %p57
      %p59 = scmp.ne.s32.totalorder %s50, %s51
      %p60 = scmp.eq.s32.totalorder %s19, 0
      %p61 = por %p59, %p60
      %p62 = scmp.ne.s32.totalorder %s50, %s51
      %p63 = scmp.eq.s32.totalorder %s20, 1
      %p64 = por %p62, %p63
      %p66 = scmp.ne.s32.totalorder %s51, %s65
      %p67 = scmp.eq.s32.totalorder %s20, 0
      %p68 = por %p66, %p67
      %s70 = sadd.s32 %s69, 1
      %p73 = scmp.eq.s32.totalorder %s14, 1
      %p74 = scmp.ne.s32.totalorder %s69, %s71
      %p75 = scmp.eq.s32.totalorder %s14, 0
      %p76 = por %p74, %p75
      %p77 = scmp.ne.s32.totalorder %s69, %s71
      %p78 = scmp.eq.s32.totalorder %s19, 1
      %p79 = por %p77, %p78
      %p80 = scmp.ne.s32.totalorder %s71, %s72
      %p81 = scmp.eq.s32.totalorder %s19, 0
      %p82 = por %p80, %p81
      %p83 = scmp.ne.s32.totalorder %s71, %s72
      %p84 = scmp.eq.s32.totalorder %s20, 1
      %p85 = por %p83, %p84
      %p87 = scmp.ne.s32.totalorder %s72, %s86
      %p88 = scmp.eq.s32.totalorder %s20, 0
      %p89 = por %p87, %p88
      %s91 = sadd.s32 %s90, 1
      %p94 = scmp.eq.s32.totalorder %s14, 1
      %p95 = scmp.ne.s32.totalorder %s90, %s92
      %p96 = scmp.eq.s32.totalorder %s14, 0
      %p97 = por %p95, %p96
      %p98 = scmp.ne.s32.totalorder %s90, %s92
      %p99 = scmp.eq.s32.totalorder %s19, 1
      %p100 = por %p98, %p99
      %p101 = scmp.ne.s32.totalorder %s92, %s93
      %p102 = scmp.eq.s32.totalorder %s19, 0
      %p103 = por %p101, %p102
      %p104 = scmp.ne.s32.totalorder %s92, %s93
      %p105 = scmp.eq.s32.totalorder %s20, 1
      %p106 = por %p104, %p105
      %p108 = scmp.ne.s32.totalorder %s93, %s107
      %p109 = scmp.eq.s32.totalorder %s20, 0
      %p110 = por %p108, %p109
      %s112 = sadd.s32 %s111, 1
      %p115 = scmp.eq.s32.totalorder %s14, 1
      %p116 = scmp.ne.s32.totalorder %s111, %s113
      %p117 = scmp.eq.s32.totalorder %s14, 0
      %p118 = por %p116, %p117
      %p119 = scmp.ne.s32.totalorder %s111, %s113
      %p120 = scmp.eq.s32.totalorder %s19, 1
      %p121 = por %p119, %p120
      %p122 = scmp.ne.s32.totalorder %s113, %s114
      %p123 = scmp.eq.s32.totalorder %s19, 0
      %p124 = por %p122, %p123
      %p125 = scmp.ne.s32.totalorder %s113, %s114
      %p126 = scmp.eq.s32.totalorder %s20, 1
      %p127 = por %p125, %p126
      %p129 = scmp.ne.s32.totalorder %s114, %s128
      %p130 = scmp.eq.s32.totalorder %s20, 0
      %p131 = por %p129, %p130
      %s132 = ssub.s32 %s14, %s21
      %p133 = scmp.eq.s32.totalorder %s132, 0
      %s135 = sadd.s32 %s134, 1
      %s136 = scalar_select %p133, %s134, %s135
      %p139 = pneg %p133
      %p140 = scmp.eq.s32.totalorder %s14, 1
      %p141 = por %p139, %p140
      %p142 = scmp.ne.s32.totalorder %s134, %s137
      %p143 = scmp.eq.s32.totalorder %s14, 0
      %p144 = por %p142, %p143
      %p145 = scmp.ne.s32.totalorder %s134, %s137
      %p146 = scmp.eq.s32.totalorder %s19, 1
      %p147 = por %p145, %p146
      %p148 = scmp.ne.s32.totalorder %s137, %s138
      %p149 = scmp.eq.s32.totalorder %s19, 0
      %p150 = por %p148, %p149
      %p151 = scmp.ne.s32.totalorder %s137, %s138
      %p152 = scmp.eq.s32.totalorder %s20, 1
      %p153 = por %p151, %p152
      %p155 = scmp.ne.s32.totalorder %s138, %s154
      %p156 = scmp.eq.s32.totalorder %s20, 0
      %p157 = por %p155, %p156
      %p158 = scmp.le.s32.totalorder 1, %s14
      %p159 = scmp.lt.s32.totalorder %s14, 3
      %p160 = pnand %p158, %p159
      %p161 = pneg %p160
      // Predicated region
      $region9: #{_fcblock_forward.1} parent=5 // pred_check
        _
      $region10: #{_fcblock_forward.1} parent=5 // pred_check_branch
        %163 = sbr.rel (%p160) target = $region12
      $region11: #{_fcblock_forward.1} parent=5 // pred_region
        %s164 = ssub.s32 %s14, 1
        // Predicated region
        $region13: #{_fcblock_forward.1} parent=11 // pred_check
          %p165 = pneg %p61
        $region14: #{_fcblock_forward.1} parent=11 // pred_check_branch
          %167 = sbr.rel (%p165) target = $region16
        $region15: #{_fcblock_forward.1} parent=11 // pred_region
          _
        $region16: #{_fcblock_forward.1} parent=11 // pred_fallthru
          _
        // Predicated region
        $region17: #{_fcblock_forward.1} parent=11 // pred_check
          %p168 = pneg %p82
        $region18: #{_fcblock_forward.1} parent=11 // pred_check_branch
          %170 = sbr.rel (%p168) target = $region20
        $region19: #{_fcblock_forward.1} parent=11 // pred_region
          _
        $region20: #{_fcblock_forward.1} parent=11 // pred_fallthru
          _
        // Predicated region
        $region21: #{_fcblock_forward.1} parent=11 // pred_check
          %p171 = pneg %p103
        $region22: #{_fcblock_forward.1} parent=11 // pred_check_branch
          %173 = sbr.rel (%p171) target = $region24
        $region23: #{_fcblock_forward.1} parent=11 // pred_region
          _
        $region24: #{_fcblock_forward.1} parent=11 // pred_fallthru
          _
        // Predicated region
        $region25: #{_fcblock_forward.1} parent=11 // pred_check
          %p174 = pneg %p124
        $region26: #{_fcblock_forward.1} parent=11 // pred_check_branch
          %176 = sbr.rel (%p174) target = $region28
        $region27: #{_fcblock_forward.1} parent=11 // pred_region
          _
        $region28: #{_fcblock_forward.1} parent=11 // pred_fallthru
          _
      $region12: #{_fcblock_forward.1} parent=5 // pred_fallthru
        _
      %p177 = scmp.lt.s32.totalorder %s14, 2
      // Predicated region
      $region29: #{_fcblock_forward.1} parent=5 // pred_check
        %p178 = pneg %p177
      $region30: #{_fcblock_forward.1} parent=5 // pred_check_branch
        %180 = sbr.rel (%p178) target = $region32
      $region31: #{_fcblock_forward.1} parent=5 // pred_region
        // Predicated region
        $region33: #{_fcblock_forward.1} parent=31 // pred_check
          %p181 = pneg %p34
        $region34: #{_fcblock_forward.1} parent=31 // pred_check_branch
          %183 = sbr.rel (%p181) target = $region36
        $region35: #{_fcblock_forward.1} parent=31 // pred_region
          %s184 = smul.u32 2, %s14
          %p185 = scmp.lt.s32.totalorder %s184, 3
          %s186 = scalar_select %p185, %s184, 3
          %s187 = smul.addr %s186, 2
          %s188 = scalar_lea.vmem %s0, %s187
          %s189 = smul.u32 2, %s14
        $region36: #{_fcblock_forward.1} parent=31 // pred_fallthru
          _
      $region32: #{_fcblock_forward.1} parent=5 // pred_fallthru
        _
      %p190 = scmp.le.s32.totalorder 1, %s14
      %p191 = scmp.lt.s32.totalorder %s14, 3
      %p192 = pnand %p190, %p191
      %p193 = pneg %p192
      // Predicated region
      $region37: #{_fcblock_forward.1} parent=5 // pred_check
        _
      $region38: #{_fcblock_forward.1} parent=5 // pred_check_branch
        %195 = sbr.rel (%p192) target = $region40
      $region39: #{_fcblock_forward.1} parent=5 // pred_region
        %s196 = ssub.s32 %s14, 1
        %s197 = smul.u32 2, %s19
        %p198 = scmp.lt.s32.totalorder %s197, 3
        %s199 = scalar_select %p198, %s197, 3
        %s200 = smul.addr %s199, 2
        %s201 = scalar_lea.vmem %s0, %s200
        %p202 = pneg %p40
        %p203 = pneg %p37
        %p204 = pneg %p61
        %p205 = pneg %p58
        %p206 = pneg %p82
        %p207 = pneg %p79
        %p208 = pneg %p103
        %p209 = pneg %p100
        %p210 = pneg %p124
        %p211 = pneg %p121
        %p212 = pneg %p150
        %p213 = pneg %p147
        %s214 = sand.u32 %s137, 1
        %s215 = scalar_lea.sflag [#allocation3], %s214
        %s216 = sand.u32 %s137, 1
        %s217 = smul.addr %s216, 8
        %s218 = scalar_lea.vmem [#allocation2], %s217
        %s219 = smul.u32 2, %s19
        %p220 = scmp.lt.s32.totalorder %s219, 3
        %s221 = scalar_select %p220, %s219, 3
        %s222 = smul.addr %s221, 2
        %s223 = scalar_lea.vmem %s0, %s222
        %s224 = smul.u32 2, %s19
        %s225 = smul.u32 2, %s19
        %v227 = vld [vmem:[%s223] sm:$0xf]
        %v228 = vld [vmem:[%s1] sm:$0xf]
        %v229 = vld [vmem:[%s1 + $0x4] sm:$0xf]
        %v230 = vld [vmem:[%s1 + $0x8] sm:$0xf]
        %v231 = vld [vmem:[%s1 + $0xc] sm:$0xf]
        %v232 = vld [vmem:[%s1 + $0x10] sm:$0xf]
        %v233 = vld [vmem:[%s1 + $0x14] sm:$0xf]
        %v240 = vunpack.c.l.b16 %v228
        %v241 = vunpack.c.l.b16 %v229
        %v242 = vunpack.c.l.b16 %v230
        %v243 = vunpack.c.l.b16 %v231
        %v244 = vunpack.c.l.b16 %v232
        %v245 = vunpack.c.l.b16 %v233
        %v246 = vpack.c.b16 %v241, %v240
        %v247 = vpack.c.b16 %v243, %v242
        %v248 = vpack.c.b16 %v245, %v244
        %v251 = vunpack.c.l.s4 1983009808
        %v252 = vunpack.c.0.s8 %v251
        %v253 = vlaneseq
        %v254 = vshrl.u32 %v253, 7
        %v255 = vsub.s32 %v252, %v254
        %v256 = vrot.slane %v227, %v255
        %v257 = vcombine.high %v256, %v256
        %vm258 = vcmask 31744
        %v260 = vsel %vm258, %v246, 0
        %v263 = vsel %vm258, %v247, 0
        %v266 = vsel %vm258, %v248, 0
        %vm268 = vcmask 1041408
        %v270 = vsel %vm268, %v256, 0
        %v273 = vsel %vm268, %v257, 0
        %275 = vmatprep.subr.bf16.mxu0 %v273
        %276 = vmatpush1.bf16.msra.mxu0 %v270
        %277 = vmatprep.subr.bf16.mxu0 0
        %278 = vmatpush1.bf16.msra.mxu0 0
        %279 = vmatprep.subr.bf16.mxu0 0
        %280 = vmatpush1.bf16.msra.mxu0 0
        %281 = vmatprep.subr.bf16.mxu0 0
        %282 = vmatpush1.bf16.msra.mxu0 0
        %283 = vmatprep.subr.bf16.mxu0 0
        %284 = vmatpush1.bf16.msra.mxu0 0
        %285 = vmatprep.subr.bf16.mxu0 0
        %286 = vmatpush1.bf16.msra.mxu0 0
        %287 = vmatprep.subr.bf16.mxu0 0
        %288 = vmatpush1.bf16.msra.mxu0 0
        %289 = vmatprep.subr.bf16.mxu0 0
        %290 = vmatpush1.bf16.msra.mxu0 0
        %291 = vmatprep.subr.bf16.mxu0 0
        %292 = vmatpush1.bf16.msra.mxu0 0
        %293 = vmatprep.subr.bf16.mxu0 0
        %294 = vmatpush1.bf16.msra.mxu0 0
        %295 = vmatprep.subr.bf16.mxu0 0
        %296 = vmatpush1.bf16.msra.mxu0 0
        %297 = vmatprep.subr.bf16.mxu0 0
        %298 = vmatpush1.bf16.msra.mxu0 0
        %299 = vmatprep.subr.bf16.mxu0 0
        %300 = vmatpush1.bf16.msra.mxu0 0
        %301 = vmatprep.subr.bf16.mxu0 0
        %302 = vmatpush1.bf16.msra.mxu0 0
        %303 = vmatprep.subr.bf16.mxu0 0
        %304 = vmatpush1.bf16.msra.mxu0 0
        %305 = vmatprep.subr.bf16.mxu0 0
        %306 = vmatpush1.bf16.msra.mxu0 0
        %307 = vmatprep.mubr.bf16.mxu0 0
        %308 = vmatmul.mubr.bf16.gmra.mrb[0].mxu0 %v260
        %v309 = vpop.f32.mrb[0].mxu0
        %v310 = vadd.f32 0.0, %v309
        %v311 = vpop.f32.mrb[0].mxu0
        %v312 = vadd.f32 0.0, %v311
        %v313 = vpop.f32.mrb[0].mxu0
        %v314 = vadd.f32 0.0, %v313
        %v315 = vpop.f32.mrb[0].mxu0
        %v316 = vadd.f32 0.0, %v315
        %317 = vmatprep.mubr.bf16.mxu0 0
        %318 = vmatmul.mubr.bf16.gmra.mrb[0].mxu0 %v263
        %v319 = vpop.f32.mrb[0].mxu0
        %v320 = vadd.f32 0.0, %v319
        %v321 = vpop.f32.mrb[0].mxu0
        %v322 = vadd.f32 0.0, %v321
        %v323 = vpop.f32.mrb[0].mxu0
        %v324 = vadd.f32 0.0, %v323
        %v325 = vpop.f32.mrb[0].mxu0
        %v326 = vadd.f32 0.0, %v325
        %327 = vmatprep.mubr.bf16.mxu0 0
        %328 = vmatmul.mubr.bf16.gmra.mrb[0].mxu0 %v266
        %v329 = vpop.f32.mrb[0].mxu0
        %v330 = vadd.f32 0.0, %v329
        %v331 = vpop.f32.mrb[0].mxu0
        %v332 = vadd.f32 0.0, %v331
        %v333 = vpop.f32.mrb[0].mxu0
        %v334 = vadd.f32 0.0, %v333
        %v335 = vpop.f32.mrb[0].mxu0
        %v336 = vadd.f32 0.0, %v335
        %337 = vdwg.mxu0
        %v338 = vmul.f32 %v334, %v334
        %v339 = vmul.f32 %v336, %v336
        %v340 = vmul.f32 %v310, %v310
        %v341 = vmul.f32 %v312, %v312
        %v342 = vmul.f32 %v314, %v314
        %v343 = vmul.f32 %v316, %v316
        %v344 = vmul.f32 %v320, %v320
        %v345 = vmul.f32 %v322, %v322
        %v346 = vmul.f32 %v324, %v324
        %v347 = vmul.f32 %v326, %v326
        %v348 = vmul.f32 %v330, %v330
        %v349 = vmul.f32 %v332, %v332
        %v350 = vadd.f32 %v340, %v342
        %v351 = vadd.f32 %v350, %v344
        %v352 = vadd.f32 %v351, %v346
        %v353 = vadd.f32 %v352, %v348
        %v354 = vadd.f32 %v353, %v338
        %v355 = vrot.slane %v354, 4
        %v356 = vadd.f32 %v354, %v355
        %v357 = vrot.slane %v356, 2
        %v358 = vadd.f32 %v356, %v357
        %v359 = vrot.slane %v358, 1
        %v360 = vadd.f32 %v358, %v359
        %v361 = vadd.f32 %v341, %v343
        %v362 = vadd.f32 %v361, %v345
        %v363 = vadd.f32 %v362, %v347
        %v364 = vadd.f32 %v363, %v349
        %v365 = vadd.f32 %v364, %v339
        %v366 = vrot.slane %v365, 4
        %v367 = vadd.f32 %v365, %v366
        %v368 = vrot.slane %v367, 2
        %v369 = vadd.f32 %v367, %v368
        %v370 = vrot.slane %v369, 1
        %v371 = vadd.f32 %v369, %v370
        %v372 = vsub.f32 %v360, %v338
        %v373 = vsub.f32 %v371, %v339
        %v374 = vmul.f32 %v372, 0.03125
        %v375 = vmul.f32 %v373, 0.03125
        %v376 = vsub.f32 %v374, %v338
        %v377 = vsub.f32 %v375, %v339
        %v378 = vlaneseq
        %v379 = vshrl.u32 %v378, 7
        %v380 = vsub.s32 7, %v379
        %v381 = vrot.slane %v334, %v380
        %v382 = vlaneseq
        %v383 = vshrl.u32 %v382, 7
        %v384 = vsub.s32 7, %v383
        %v385 = vrot.slane %v336, %v384
        %v386 = vsub.f32 %v310, %v381
        %v387 = vsub.f32 %v312, %v385
        %v388 = vsub.f32 %v314, %v381
        %v389 = vsub.f32 %v316, %v385
        %v390 = vsub.f32 %v320, %v381
        %v391 = vsub.f32 %v322, %v385
        %v392 = vsub.f32 %v324, %v381
        %v393 = vsub.f32 %v326, %v385
        %v394 = vsub.f32 %v330, %v381
        %v395 = vsub.f32 %v332, %v385
        %v396 = vsub.f32 %v334, %v381
        %v397 = vsub.f32 %v336, %v385
        %v398 = vadd.f32 %v376, 1e-05
        %v399 = vadd.f32 %v377, 1e-05
        %v400 = vrsqrt.pop %v398
        %v401 = vrsqrt.pop %v399
        %v402 = vlaneseq
        %v403 = vshrl.u32 %v402, 7
        %v404 = vsub.s32 7, %v403
        %v405 = vrot.slane %v400, %v404
        %v406 = vlaneseq
        %v407 = vshrl.u32 %v406, 7
        %v408 = vsub.s32 7, %v407
        %v409 = vrot.slane %v401, %v408
        %v410 = vmul.f32 %v386, %v405
        %v411 = vmul.f32 %v387, %v409
        %v412 = vmul.f32 %v388, %v405
        %v413 = vmul.f32 %v389, %v409
        %v414 = vmul.f32 %v390, %v405
        %v415 = vmul.f32 %v391, %v409
        %v416 = vmul.f32 %v392, %v405
        %v417 = vmul.f32 %v393, %v409
        %v418 = vmul.f32 %v394, %v405
        %v419 = vmul.f32 %v395, %v409
        %v420 = vmul.f32 %v396, %v405
        %v421 = vmul.f32 %v397, %v409
        %v422 = vld [vmem:[%s3] sm:$0xff]
        %v423 = vld [vmem:[%s3 + $0x8] sm:$0xff]
        %v424 = vld [vmem:[%s3 + $0x10] sm:$0xff]
        %v425 = vld [vmem:[%s3 + $0x18] sm:$0xff]
        %v426 = vld [vmem:[%s3 + $0x20] sm:$0xff]
        %v427 = vld [vmem:[%s3 + $0x28] sm:$0xff]
        %429 = vset.pattern.permute.xlu0 0
        %430 = vperm.xlu0 %429, %v422
        %v431 = vpop.permute.xlu0 %430
        %434 = vset.pattern.permute.xlu0 0
        %435 = vperm.xlu0 %434, %v423
        %v436 = vpop.permute.xlu0 %435
        %439 = vset.pattern.permute.xlu0 0
        %440 = vperm.xlu0 %439, %v424
        %v441 = vpop.permute.xlu0 %440
        %444 = vset.pattern.permute.xlu0 0
        %445 = vperm.xlu0 %444, %v425
        %v446 = vpop.permute.xlu0 %445
        %449 = vset.pattern.permute.xlu0 0
        %450 = vperm.xlu0 %449, %v426
        %v451 = vpop.permute.xlu0 %450
        %454 = vset.pattern.permute.xlu0 0
        %455 = vperm.xlu0 %454, %v427
        %v456 = vpop.permute.xlu0 %455
        %v458 = vmul.f32 %v410, %v431
        %v459 = vmul.f32 %v411, %v431
        %v460 = vmul.f32 %v412, %v436
        %v461 = vmul.f32 %v413, %v436
        %v462 = vmul.f32 %v414, %v441
        %v463 = vmul.f32 %v415, %v441
        %v464 = vmul.f32 %v416, %v446
        %v465 = vmul.f32 %v417, %v446
        %v466 = vmul.f32 %v418, %v451
        %v467 = vmul.f32 %v419, %v451
        %v468 = vmul.f32 %v420, %v456
        %v469 = vmul.f32 %v421, %v456
        %v470 = vld [vmem:[%s4] sm:$0xff]
        %v471 = vld [vmem:[%s4 + $0x8] sm:$0xff]
        %v472 = vld [vmem:[%s4 + $0x10] sm:$0xff]
        %v473 = vld [vmem:[%s4 + $0x18] sm:$0xff]
        %v474 = vld [vmem:[%s4 + $0x20] sm:$0xff]
        %v475 = vld [vmem:[%s4 + $0x28] sm:$0xff]
        %477 = vset.pattern.permute.xlu0 0
        %478 = vperm.xlu0 %477, %v470
        %v479 = vpop.permute.xlu0 %478
        %482 = vset.pattern.permute.xlu0 0
        %483 = vperm.xlu0 %482, %v471
        %v484 = vpop.permute.xlu0 %483
        %487 = vset.pattern.permute.xlu0 0
        %488 = vperm.xlu0 %487, %v472
        %v489 = vpop.permute.xlu0 %488
        %492 = vset.pattern.permute.xlu0 0
        %493 = vperm.xlu0 %492, %v473
        %v494 = vpop.permute.xlu0 %493
        %497 = vset.pattern.permute.xlu0 0
        %498 = vperm.xlu0 %497, %v474
        %v499 = vpop.permute.xlu0 %498
        %502 = vset.pattern.permute.xlu0 0
        %503 = vperm.xlu0 %502, %v475
        %v504 = vpop.permute.xlu0 %503
        %v506 = vadd.f32 %v458, %v479
        %v507 = vadd.f32 %v459, %v479
        %v508 = vadd.f32 %v460, %v484
        %v509 = vadd.f32 %v461, %v484
        %v510 = vadd.f32 %v462, %v489
        %v511 = vadd.f32 %v463, %v489
        %v512 = vadd.f32 %v464, %v494
        %v513 = vadd.f32 %v465, %v494
        %v514 = vadd.f32 %v466, %v499
        %v515 = vadd.f32 %v467, %v499
        %v516 = vadd.f32 %v468, %v504
        %v517 = vadd.f32 %v469, %v504
        %v518 = vmax.f32 %v506, 0.0
        %v519 = vmax.f32 %v507, 0.0
        %v520 = vmax.f32 %v508, 0.0
        %v521 = vmax.f32 %v509, 0.0
        %v522 = vmax.f32 %v510, 0.0
        %v523 = vmax.f32 %v511, 0.0
        %v524 = vmax.f32 %v512, 0.0
        %v525 = vmax.f32 %v513, 0.0
        %v526 = vmax.f32 %v514, 0.0
        %v527 = vmax.f32 %v515, 0.0
        %v528 = vmax.f32 %v516, 0.0
        %v529 = vmax.f32 %v517, 0.0
        %v530 = vpack.c.bf16 %v520, %v518
        %v531 = vpack.c.bf16 %v521, %v519
        %v532 = vpack.c.bf16 %v524, %v522
        %v533 = vpack.c.bf16 %v525, %v523
        %v534 = vpack.c.bf16 %v528, %v526
        %v535 = vpack.c.bf16 %v529, %v527
        %v536 = vld [vmem:[%s2] sm:$0xf]
        %v537 = vld [vmem:[%s2 + $0x4] sm:$0xf]
        %v538 = vld [vmem:[%s2 + $0x8] sm:$0xf]
        %v539 = vld [vmem:[%s2 + $0xc] sm:$0xf]
        %v540 = vld [vmem:[%s2 + $0x10] sm:$0xf]
        %v541 = vld [vmem:[%s2 + $0x14] sm:$0xf]
        %v548 = vunpack.c.l.b16 %v536
        %v549 = vunpack.c.l.b16 %v537
        %v550 = vunpack.c.l.b16 %v538
        %v551 = vunpack.c.l.b16 %v539
        %v552 = vunpack.c.l.b16 %v540
        %v553 = vunpack.c.l.b16 %v541
        %v554 = vpack.c.b16 %v549, %v548
        %v555 = vpack.c.b16 %v551, %v550
        %v556 = vpack.c.b16 %v553, %v552
        %vm557 = vcmask 392192
        %v559 = vsel %vm557, %v554, 0
        %v562 = vsel %vm557, %v555, 0
        %v565 = vsel %vm557, %v556, 0
        %567 = vmatprep.subr.bf16.mxu0 %v531
        %568 = vmatpush1.bf16.msra.mxu0 %v530
        %569 = vmatprep.subr.bf16.mxu0 %v533
        %570 = vmatpush1.bf16.msra.mxu0 %v532
        %571 = vmatprep.subr.bf16.mxu0 %v535
        %572 = vmatpush1.bf16.msra.mxu0 %v534
        %573 = vmatprep.subr.bf16.mxu0 0
        %574 = vmatpush1.bf16.msra.mxu0 0
        %575 = vmatprep.subr.bf16.mxu0 0
        %576 = vmatpush1.bf16.msra.mxu0 0
        %577 = vmatprep.subr.bf16.mxu0 0
        %578 = vmatpush1.bf16.msra.mxu0 0
        %579 = vmatprep.subr.bf16.mxu0 0
        %580 = vmatpush1.bf16.msra.mxu0 0
        %581 = vmatprep.subr.bf16.mxu0 0
        %582 = vmatpush1.bf16.msra.mxu0 0
        %583 = vmatprep.subr.bf16.mxu0 0
        %584 = vmatpush1.bf16.msra.mxu0 0
        %585 = vmatprep.subr.bf16.mxu0 0
        %586 = vmatpush1.bf16.msra.mxu0 0
        %587 = vmatprep.subr.bf16.mxu0 0
        %588 = vmatpush1.bf16.msra.mxu0 0
        %589 = vmatprep.subr.bf16.mxu0 0
        %590 = vmatpush1.bf16.msra.mxu0 0
        %591 = vmatprep.subr.bf16.mxu0 0
        %592 = vmatpush1.bf16.msra.mxu0 0
        %593 = vmatprep.subr.bf16.mxu0 0
        %594 = vmatpush1.bf16.msra.mxu0 0
        %595 = vmatprep.subr.bf16.mxu0 0
        %596 = vmatpush1.bf16.msra.mxu0 0
        %597 = vmatprep.subr.bf16.mxu0 0
        %598 = vmatpush1.bf16.msra.mxu0 0
        %599 = vmatprep.mubr.bf16.mxu0 0
        %600 = vmatmul.mubr.bf16.gmra.mrb[0].mxu0 %v559
        %v601 = vpop.f32.mrb[0].mxu0
        %v602 = vadd.f32 0.0, %v601
        %v603 = vpop.f32.mrb[0].mxu0
        %v604 = vadd.f32 0.0, %v603
        %v605 = vpop.f32.mrb[0].mxu0
        %v606 = vadd.f32 0.0, %v605
        %v607 = vpop.f32.mrb[0].mxu0
        %v608 = vadd.f32 0.0, %v607
        %609 = vmatprep.mubr.bf16.mxu0 0
        %610 = vmatmul.mubr.bf16.gmra.mrb[0].mxu0 %v562
        %v611 = vpop.f32.mrb[0].mxu0
        %v612 = vadd.f32 0.0, %v611
        %v613 = vpop.f32.mrb[0].mxu0
        %v614 = vadd.f32 0.0, %v613
        %v615 = vpop.f32.mrb[0].mxu0
        %v616 = vadd.f32 0.0, %v615
        %v617 = vpop.f32.mrb[0].mxu0
        %v618 = vadd.f32 0.0, %v617
        %619 = vmatprep.mubr.bf16.mxu0 0
        %620 = vmatmul.mubr.bf16.gmra.mrb[0].mxu0 %v565
        %v621 = vpop.f32.mrb[0].mxu0
        %v622 = vadd.f32 0.0, %v621
        %v623 = vpop.f32.mrb[0].mxu0
        %v624 = vadd.f32 0.0, %v623
        %v625 = vpop.f32.mrb[0].mxu0
        %v626 = vadd.f32 0.0, %v625
        %v627 = vpop.f32.mrb[0].mxu0
        %v628 = vadd.f32 0.0, %v627
        %629 = vdwg.mxu0
        %v630 = vmul.f32 %v626, %v626
        %v631 = vmul.f32 %v628, %v628
        %v632 = vmul.f32 %v602, %v602
        %v633 = vmul.f32 %v604, %v604
        %v634 = vmul.f32 %v606, %v606
        %v635 = vmul.f32 %v608, %v608
        %v636 = vmul.f32 %v612, %v612
        %v637 = vmul.f32 %v614, %v614
        %v638 = vmul.f32 %v616, %v616
        %v639 = vmul.f32 %v618, %v618
        %v640 = vmul.f32 %v622, %v622
        %v641 = vmul.f32 %v624, %v624
        %v642 = vadd.f32 %v632, %v634
        %v643 = vadd.f32 %v642, %v636
        %v644 = vadd.f32 %v643, %v638
        %v645 = vadd.f32 %v644, %v640
        %v646 = vadd.f32 %v645, %v630
        %v647 = vrot.slane %v646, 4
        %v648 = vadd.f32 %v646, %v647
        %v649 = vrot.slane %v648, 2
        %v650 = vadd.f32 %v648, %v649
        %v651 = vrot.slane %v650, 1
        %v652 = vadd.f32 %v650, %v651
        %v653 = vadd.f32 %v633, %v635
        %v654 = vadd.f32 %v653, %v637
        %v655 = vadd.f32 %v654, %v639
        %v656 = vadd.f32 %v655, %v641
        %v657 = vadd.f32 %v656, %v631
        %v658 = vrot.slane %v657, 4
        %v659 = vadd.f32 %v657, %v658
        %v660 = vrot.slane %v659, 2
        %v661 = vadd.f32 %v659, %v660
        %v662 = vrot.slane %v661, 1
        %v663 = vadd.f32 %v661, %v662
        %v664 = vsub.f32 %v652, %v630
        %v665 = vsub.f32 %v663, %v631
        %v666 = vmul.f32 %v664, 0.03125
        %v667 = vmul.f32 %v665, 0.03125
        %v668 = vsub.f32 %v666, %v630
        %v669 = vsub.f32 %v667, %v631
        %v670 = vlaneseq
        %v671 = vshrl.u32 %v670, 7
        %v672 = vsub.s32 7, %v671
        %v673 = vrot.slane %v626, %v672
        %v674 = vlaneseq
        %v675 = vshrl.u32 %v674, 7
        %v676 = vsub.s32 7, %v675
        %v677 = vrot.slane %v628, %v676
        %v678 = vsub.f32 %v602, %v673
        %v679 = vsub.f32 %v604, %v677
        %v680 = vsub.f32 %v606, %v673
        %v681 = vsub.f32 %v608, %v677
        %v682 = vsub.f32 %v612, %v673
        %v683 = vsub.f32 %v614, %v677
        %v684 = vsub.f32 %v616, %v673
        %v685 = vsub.f32 %v618, %v677
        %v686 = vsub.f32 %v622, %v673
        %v687 = vsub.f32 %v624, %v677
        %v688 = vsub.f32 %v626, %v673
        %v689 = vsub.f32 %v628, %v677
        %v690 = vadd.f32 %v668, 1e-05
        %v691 = vadd.f32 %v669, 1e-05
        %v692 = vrsqrt.pop %v690
        %v693 = vrsqrt.pop %v691
        %v694 = vlaneseq
        %v695 = vshrl.u32 %v694, 7
        %v696 = vsub.s32 7, %v695
        %v697 = vrot.slane %v692, %v696
        %v698 = vlaneseq
        %v699 = vshrl.u32 %v698, 7
        %v700 = vsub.s32 7, %v699
        %v701 = vrot.slane %v693, %v700
        %v702 = vmul.f32 %v678, %v697
        %v703 = vmul.f32 %v679, %v701
        %v704 = vmul.f32 %v680, %v697
        %v705 = vmul.f32 %v681, %v701
        %v706 = vmul.f32 %v682, %v697
        %v707 = vmul.f32 %v683, %v701
        %v708 = vmul.f32 %v684, %v697
        %v709 = vmul.f32 %v685, %v701
        %v710 = vmul.f32 %v686, %v697
        %v711 = vmul.f32 %v687, %v701
        %v712 = vmul.f32 %v688, %v697
        %v713 = vmul.f32 %v689, %v701
        %s714 = scalar_lea.vmem %s3, 48
        %v715 = vld [vmem:[%s714] sm:$0xff]
        %v716 = vld [vmem:[%s714 + $0x8] sm:$0xff]
        %v717 = vld [vmem:[%s714 + $0x10] sm:$0xff]
        %v718 = vld [vmem:[%s714 + $0x18] sm:$0xff]
        %v719 = vld [vmem:[%s714 + $0x20] sm:$0xff]
        %v720 = vld [vmem:[%s714 + $0x28] sm:$0xff]
        %722 = vset.pattern.permute.xlu0 0
        %723 = vperm.xlu0 %722, %v715
        %v724 = vpop.permute.xlu0 %723
        %727 = vset.pattern.permute.xlu0 0
        %728 = vperm.xlu0 %727, %v716
        %v729 = vpop.permute.xlu0 %728
        %732 = vset.pattern.permute.xlu0 0
        %733 = vperm.xlu0 %732, %v717
        %v734 = vpop.permute.xlu0 %733
        %737 = vset.pattern.permute.xlu0 0
        %738 = vperm.xlu0 %737, %v718
        %v739 = vpop.permute.xlu0 %738
        %742 = vset.pattern.permute.xlu0 0
        %743 = vperm.xlu0 %742, %v719
        %v744 = vpop.permute.xlu0 %743
        %747 = vset.pattern.permute.xlu0 0
        %748 = vperm.xlu0 %747, %v720
        %v749 = vpop.permute.xlu0 %748
        %v751 = vmul.f32 %v702, %v724
        %v752 = vmul.f32 %v703, %v724
        %v753 = vmul.f32 %v704, %v729
        %v754 = vmul.f32 %v705, %v729
        %v755 = vmul.f32 %v706, %v734
        %v756 = vmul.f32 %v707, %v734
        %v757 = vmul.f32 %v708, %v739
        %v758 = vmul.f32 %v709, %v739
        %v759 = vmul.f32 %v710, %v744
        %v760 = vmul.f32 %v711, %v744
        %v761 = vmul.f32 %v712, %v749
        %v762 = vmul.f32 %v713, %v749
        %s763 = scalar_lea.vmem %s4, 48
        %v764 = vld [vmem:[%s763] sm:$0xff]
        %v765 = vld [vmem:[%s763 + $0x8] sm:$0xff]
        %v766 = vld [vmem:[%s763 + $0x10] sm:$0xff]
        %v767 = vld [vmem:[%s763 + $0x18] sm:$0xff]
        %v768 = vld [vmem:[%s763 + $0x20] sm:$0xff]
        %v769 = vld [vmem:[%s763 + $0x28] sm:$0xff]
        %771 = vset.pattern.permute.xlu0 0
        %772 = vperm.xlu0 %771, %v764
        %v773 = vpop.permute.xlu0 %772
        %776 = vset.pattern.permute.xlu0 0
        %777 = vperm.xlu0 %776, %v765
        %v778 = vpop.permute.xlu0 %777
        %781 = vset.pattern.permute.xlu0 0
        %782 = vperm.xlu0 %781, %v766
        %v783 = vpop.permute.xlu0 %782
        %786 = vset.pattern.permute.xlu0 0
        %787 = vperm.xlu0 %786, %v767
        %v788 = vpop.permute.xlu0 %787
        %791 = vset.pattern.permute.xlu0 0
        %792 = vperm.xlu0 %791, %v768
        %v793 = vpop.permute.xlu0 %792
        %796 = vset.pattern.permute.xlu0 0
        %797 = vperm.xlu0 %796, %v769
        %v798 = vpop.permute.xlu0 %797
        %v800 = vadd.f32 %v751, %v773
        %v801 = vadd.f32 %v752, %v773
        %v802 = vadd.f32 %v753, %v778
        %v803 = vadd.f32 %v754, %v778
        %v804 = vadd.f32 %v755, %v783
        %v805 = vadd.f32 %v756, %v783
        %v806 = vadd.f32 %v757, %v788
        %v807 = vadd.f32 %v758, %v788
        %v808 = vadd.f32 %v759, %v793
        %v809 = vadd.f32 %v760, %v793
        %v810 = vadd.f32 %v761, %v798
        %v811 = vadd.f32 %v762, %v798
        %v812 = vmax.f32 %v800, 0.0
        %v813 = vmax.f32 %v801, 0.0
        %v814 = vmax.f32 %v802, 0.0
        %v815 = vmax.f32 %v803, 0.0
        %v816 = vmax.f32 %v804, 0.0
        %v817 = vmax.f32 %v805, 0.0
        %v818 = vmax.f32 %v806, 0.0
        %v819 = vmax.f32 %v807, 0.0
        %v820 = vmax.f32 %v808, 0.0
        %v821 = vmax.f32 %v809, 0.0
        %v822 = vmax.f32 %v810, 0.0
        %v823 = vmax.f32 %v811, 0.0
        %v824 = vpack.c.bf16 %v814, %v812
        %v825 = vpack.c.bf16 %v815, %v813
        %v826 = vpack.c.bf16 %v818, %v816
        %v827 = vpack.c.bf16 %v819, %v817
        %v828 = vpack.c.bf16 %v822, %v820
        %v829 = vpack.c.bf16 %v823, %v821
        %s830 = scalar_lea.vmem %s2, 24
        %v831 = vld [vmem:[%s830] sm:$0xf]
        %v832 = vld [vmem:[%s830 + $0x4] sm:$0xf]
        %v833 = vld [vmem:[%s830 + $0x8] sm:$0xf]
        %v834 = vld [vmem:[%s830 + $0xc] sm:$0xf]
        %v835 = vld [vmem:[%s830 + $0x10] sm:$0xf]
        %v836 = vld [vmem:[%s830 + $0x14] sm:$0xf]
        %v843 = vunpack.c.l.b16 %v831
        %v844 = vunpack.c.l.b16 %v832
        %v845 = vunpack.c.l.b16 %v833
        %v846 = vunpack.c.l.b16 %v834
        %v847 = vunpack.c.l.b16 %v835
        %v848 = vunpack.c.l.b16 %v836
        %v849 = vpack.c.b16 %v844, %v843
        %v850 = vpack.c.b16 %v846, %v845
        %v851 = vpack.c.b16 %v848, %v847
        %v853 = vsel %vm557, %v849, 0
        %v856 = vsel %vm557, %v850, 0
        %v859 = vsel %vm557, %v851, 0
        %861 = vmatprep.subr.bf16.mxu0 %v825
        %862 = vmatpush1.bf16.msra.mxu0 %v824
        %863 = vmatprep.subr.bf16.mxu0 %v827
        %864 = vmatpush1.bf16.msra.mxu0 %v826
        %865 = vmatprep.subr.bf16.mxu0 %v829
        %866 = vmatpush1.bf16.msra.mxu0 %v828
        %867 = vmatprep.subr.bf16.mxu0 0
        %868 = vmatpush1.bf16.msra.mxu0 0
        %869 = vmatprep.subr.bf16.mxu0 0
        %870 = vmatpush1.bf16.msra.mxu0 0
        %871 = vmatprep.subr.bf16.mxu0 0
        %872 = vmatpush1.bf16.msra.mxu0 0
        %873 = vmatprep.subr.bf16.mxu0 0
        %874 = vmatpush1.bf16.msra.mxu0 0
        %875 = vmatprep.subr.bf16.mxu0 0
        %876 = vmatpush1.bf16.msra.mxu0 0
        %877 = vmatprep.subr.bf16.mxu0 0
        %878 = vmatpush1.bf16.msra.mxu0 0
        %879 = vmatprep.subr.bf16.mxu0 0
        %880 = vmatpush1.bf16.msra.mxu0 0
        %881 = vmatprep.subr.bf16.mxu0 0
        %882 = vmatpush1.bf16.msra.mxu0 0
        %883 = vmatprep.subr.bf16.mxu0 0
        %884 = vmatpush1.bf16.msra.mxu0 0
        %885 = vmatprep.subr.bf16.mxu0 0
        %886 = vmatpush1.bf16.msra.mxu0 0
        %887 = vmatprep.subr.bf16.mxu0 0
        %888 = vmatpush1.bf16.msra.mxu0 0
        %889 = vmatprep.subr.bf16.mxu0 0
        %890 = vmatpush1.bf16.msra.mxu0 0
        %891 = vmatprep.subr.bf16.mxu0 0
        %892 = vmatpush1.bf16.msra.mxu0 0
        %893 = vmatprep.mubr.bf16.mxu0 0
        %894 = vmatmul.mubr.bf16.gmra.mrb[0].mxu0 %v853
        %v895 = vpop.f32.mrb[0].mxu0
        %v896 = vadd.f32 0.0, %v895
        %v897 = vpop.f32.mrb[0].mxu0
        %v898 = vadd.f32 0.0, %v897
        %v899 = vpop.f32.mrb[0].mxu0
        %v900 = vadd.f32 0.0, %v899
        %v901 = vpop.f32.mrb[0].mxu0
        %v902 = vadd.f32 0.0, %v901
        %903 = vmatprep.mubr.bf16.mxu0 0
        %904 = vmatmul.mubr.bf16.gmra.mrb[0].mxu0 %v856
        %v905 = vpop.f32.mrb[0].mxu0
        %v906 = vadd.f32 0.0, %v905
        %v907 = vpop.f32.mrb[0].mxu0
        %v908 = vadd.f32 0.0, %v907
        %v909 = vpop.f32.mrb[0].mxu0
        %v910 = vadd.f32 0.0, %v909
        %v911 = vpop.f32.mrb[0].mxu0
        %v912 = vadd.f32 0.0, %v911
        %913 = vmatprep.mubr.bf16.mxu0 0
        %914 = vmatmul.mubr.bf16.gmra.mrb[0].mxu0 %v859
        %v915 = vpop.f32.mrb[0].mxu0
        %v916 = vadd.f32 0.0, %v915
        %v917 = vpop.f32.mrb[0].mxu0
        %v918 = vadd.f32 0.0, %v917
        %v919 = vpop.f32.mrb[0].mxu0
        %v920 = vadd.f32 0.0, %v919
        %v921 = vpop.f32.mrb[0].mxu0
        %v922 = vadd.f32 0.0, %v921
        %923 = vdwg.mxu0
        %v924 = vmul.f32 %v920, %v920
        %v925 = vmul.f32 %v922, %v922
        %v926 = vmul.f32 %v896, %v896
        %v927 = vmul.f32 %v898, %v898
        %v928 = vmul.f32 %v900, %v900
        %v929 = vmul.f32 %v902, %v902
        %v930 = vmul.f32 %v906, %v906
        %v931 = vmul.f32 %v908, %v908
        %v932 = vmul.f32 %v910, %v910
        %v933 = vmul.f32 %v912, %v912
        %v934 = vmul.f32 %v916, %v916
        %v935 = vmul.f32 %v918, %v918
        %v936 = vadd.f32 %v926, %v928
        %v937 = vadd.f32 %v936, %v930
        %v938 = vadd.f32 %v937, %v932
        %v939 = vadd.f32 %v938, %v934
        %v940 = vadd.f32 %v939, %v924
        %v941 = vrot.slane %v940, 4
        %v942 = vadd.f32 %v940, %v941
        %v943 = vrot.slane %v942, 2
        %v944 = vadd.f32 %v942, %v943
        %v945 = vrot.slane %v944, 1
        %v946 = vadd.f32 %v944, %v945
        %v947 = vadd.f32 %v927, %v929
        %v948 = vadd.f32 %v947, %v931
        %v949 = vadd.f32 %v948, %v933
        %v950 = vadd.f32 %v949, %v935
        %v951 = vadd.f32 %v950, %v925
        %v952 = vrot.slane %v951, 4
        %v953 = vadd.f32 %v951, %v952
        %v954 = vrot.slane %v953, 2
        %v955 = vadd.f32 %v953, %v954
        %v956 = vrot.slane %v955, 1
        %v957 = vadd.f32 %v955, %v956
        %v958 = vsub.f32 %v946, %v924
        %v959 = vsub.f32 %v957, %v925
        %v960 = vmul.f32 %v958, 0.03125
        %v961 = vmul.f32 %v959, 0.03125
        %v962 = vsub.f32 %v960, %v924
        %v963 = vsub.f32 %v961, %v925
        %v964 = vlaneseq
        %v965 = vshrl.u32 %v964, 7
        %v966 = vsub.s32 7, %v965
        %v967 = vrot.slane %v920, %v966
        %v968 = vlaneseq
        %v969 = vshrl.u32 %v968, 7
        %v970 = vsub.s32 7, %v969
        %v971 = vrot.slane %v922, %v970
        %v972 = vsub.f32 %v896, %v967
        %v973 = vsub.f32 %v898, %v971
        %v974 = vsub.f32 %v900, %v967
        %v975 = vsub.f32 %v902, %v971
        %v976 = vsub.f32 %v906, %v967
        %v977 = vsub.f32 %v908, %v971
        %v978 = vsub.f32 %v910, %v967
        %v979 = vsub.f32 %v912, %v971
        %v980 = vsub.f32 %v916, %v967
        %v981 = vsub.f32 %v918, %v971
        %v982 = vsub.f32 %v920, %v967
        %v983 = vsub.f32 %v922, %v971
        %v984 = vadd.f32 %v962, 1e-05
        %v985 = vadd.f32 %v963, 1e-05
        %v986 = vrsqrt.pop %v984
        %v987 = vrsqrt.pop %v985
        %v988 = vlaneseq
        %v989 = vshrl.u32 %v988, 7
        %v990 = vsub.s32 7, %v989
        %v991 = vrot.slane %v986, %v990
        %v992 = vlaneseq
        %v993 = vshrl.u32 %v992, 7
        %v994 = vsub.s32 7, %v993
        %v995 = vrot.slane %v987, %v994
        %v996 = vmul.f32 %v972, %v991
        %v997 = vmul.f32 %v973, %v995
        %v998 = vmul.f32 %v974, %v991
        %v999 = vmul.f32 %v975, %v995
        %v1000 = vmul.f32 %v976, %v991
        %v1001 = vmul.f32 %v977, %v995
        %v1002 = vmul.f32 %v978, %v991
        %v1003 = vmul.f32 %v979, %v995
        %v1004 = vmul.f32 %v980, %v991
        %v1005 = vmul.f32 %v981, %v995
        %v1006 = vmul.f32 %v982, %v991
        %v1007 = vmul.f32 %v983, %v995
        %s1008 = scalar_lea.vmem %s3, 96
        %v1009 = vld [vmem:[%s1008] sm:$0xff]
        %v1010 = vld [vmem:[%s1008 + $0x8] sm:$0xff]
        %v1011 = vld [vmem:[%s1008 + $0x10] sm:$0xff]
        %v1012 = vld [vmem:[%s1008 + $0x18] sm:$0xff]
        %v1013 = vld [vmem:[%s1008 + $0x20] sm:$0xff]
        %v1014 = vld [vmem:[%s1008 + $0x28] sm:$0xff]
        %1016 = vset.pattern.permute.xlu0 0
        %1017 = vperm.xlu0 %1016, %v1009
        %v1018 = vpop.permute.xlu0 %1017
        %1021 = vset.pattern.permute.xlu0 0
        %1022 = vperm.xlu0 %1021, %v1010
        %v1023 = vpop.permute.xlu0 %1022
        %1026 = vset.pattern.permute.xlu0 0
        %1027 = vperm.xlu0 %1026, %v1011
        %v1028 = vpop.permute.xlu0 %1027
        %1031 = vset.pattern.permute.xlu0 0
        %1032 = vperm.xlu0 %1031, %v1012
        %v1033 = vpop.permute.xlu0 %1032
        %1036 = vset.pattern.permute.xlu0 0
        %1037 = vperm.xlu0 %1036, %v1013
        %v1038 = vpop.permute.xlu0 %1037
        %1041 = vset.pattern.permute.xlu0 0
        %1042 = vperm.xlu0 %1041, %v1014
        %v1043 = vpop.permute.xlu0 %1042
        %v1045 = vmul.f32 %v996, %v1018
        %v1046 = vmul.f32 %v997, %v1018
        %v1047 = vmul.f32 %v998, %v1023
        %v1048 = vmul.f32 %v999, %v1023
        %v1049 = vmul.f32 %v1000, %v1028
        %v1050 = vmul.f32 %v1001, %v1028
        %v1051 = vmul.f32 %v1002, %v1033
        %v1052 = vmul.f32 %v1003, %v1033
        %v1053 = vmul.f32 %v1004, %v1038
        %v1054 = vmul.f32 %v1005, %v1038
        %v1055 = vmul.f32 %v1006, %v1043
        %v1056 = vmul.f32 %v1007, %v1043
        %s1057 = scalar_lea.vmem %s4, 96
        %v1058 = vld [vmem:[%s1057] sm:$0xff]
        %v1059 = vld [vmem:[%s1057 + $0x8] sm:$0xff]
        %v1060 = vld [vmem:[%s1057 + $0x10] sm:$0xff]
        %v1061 = vld [vmem:[%s1057 + $0x18] sm:$0xff]
        %v1062 = vld [vmem:[%s1057 + $0x20] sm:$0xff]
        %v1063 = vld [vmem:[%s1057 + $0x28] sm:$0xff]
        %1065 = vset.pattern.permute.xlu0 0
        %1066 = vperm.xlu0 %1065, %v1058
        %v1067 = vpop.permute.xlu0 %1066
        %1070 = vset.pattern.permute.xlu0 0
        %1071 = vperm.xlu0 %1070, %v1059
        %v1072 = vpop.permute.xlu0 %1071
        %1075 = vset.pattern.permute.xlu0 0
        %1076 = vperm.xlu0 %1075, %v1060
        %v1077 = vpop.permute.xlu0 %1076
        %1080 = vset.pattern.permute.xlu0 0
        %1081 = vperm.xlu0 %1080, %v1061
        %v1082 = vpop.permute.xlu0 %1081
        %1085 = vset.pattern.permute.xlu0 0
        %1086 = vperm.xlu0 %1085, %v1062
        %v1087 = vpop.permute.xlu0 %1086
        %1090 = vset.pattern.permute.xlu0 0
        %1091 = vperm.xlu0 %1090, %v1063
        %v1092 = vpop.permute.xlu0 %1091
        %v1094 = vadd.f32 %v1045, %v1067
        %v1095 = vadd.f32 %v1046, %v1067
        %v1096 = vadd.f32 %v1047, %v1072
        %v1097 = vadd.f32 %v1048, %v1072
        %v1098 = vadd.f32 %v1049, %v1077
        %v1099 = vadd.f32 %v1050, %v1077
        %v1100 = vadd.f32 %v1051, %v1082
        %v1101 = vadd.f32 %v1052, %v1082
        %v1102 = vadd.f32 %v1053, %v1087
        %v1103 = vadd.f32 %v1054, %v1087
        %v1104 = vadd.f32 %v1055, %v1092
        %v1105 = vadd.f32 %v1056, %v1092
        %v1106 = vmax.f32 %v1094, 0.0
        %v1107 = vmax.f32 %v1095, 0.0
        %v1108 = vmax.f32 %v1096, 0.0
        %v1109 = vmax.f32 %v1097, 0.0
        %v1110 = vmax.f32 %v1098, 0.0
        %v1111 = vmax.f32 %v1099, 0.0
        %v1112 = vmax.f32 %v1100, 0.0
        %v1113 = vmax.f32 %v1101, 0.0
        %v1114 = vmax.f32 %v1102, 0.0
        %v1115 = vmax.f32 %v1103, 0.0
        %v1116 = vmax.f32 %v1104, 0.0
        %v1117 = vmax.f32 %v1105, 0.0
        %v1118 = vpack.c.bf16 %v1108, %v1106
        %v1119 = vpack.c.bf16 %v1109, %v1107
        %v1120 = vpack.c.bf16 %v1112, %v1110
        %v1121 = vpack.c.bf16 %v1113, %v1111
        %v1122 = vpack.c.bf16 %v1116, %v1114
        %v1123 = vpack.c.bf16 %v1117, %v1115
        %s1124 = scalar_lea.vmem %s2, 48
        %v1125 = vld [vmem:[%s1124] sm:$0xf]
        %v1126 = vld [vmem:[%s1124 + $0x4] sm:$0xf]
        %v1127 = vld [vmem:[%s1124 + $0x8] sm:$0xf]
        %v1128 = vld [vmem:[%s1124 + $0xc] sm:$0xf]
        %v1129 = vld [vmem:[%s1124 + $0x10] sm:$0xf]
        %v1130 = vld [vmem:[%s1124 + $0x14] sm:$0xf]
        %v1137 = vunpack.c.l.b16 %v1125
        %v1138 = vunpack.c.l.b16 %v1126
        %v1139 = vunpack.c.l.b16 %v1127
        %v1140 = vunpack.c.l.b16 %v1128
        %v1141 = vunpack.c.l.b16 %v1129
        %v1142 = vunpack.c.l.b16 %v1130
        %v1143 = vpack.c.b16 %v1138, %v1137
        %v1144 = vpack.c.b16 %v1140, %v1139
        %v1145 = vpack.c.b16 %v1142, %v1141
        %v1147 = vsel %vm557, %v1143, 0
        %v1150 = vsel %vm557, %v1144, 0
        %v1153 = vsel %vm557, %v1145, 0
        %1155 = vmatprep.subr.bf16.mxu0 %v1119
        %1156 = vmatpush1.bf16.msra.mxu0 %v1118
        %1157 = vmatprep.subr.bf16.mxu0 %v1121
        %1158 = vmatpush1.bf16.msra.mxu0 %v1120
        %1159 = vmatprep.subr.bf16.mxu0 %v1123
        %1160 = vmatpush1.bf16.msra.mxu0 %v1122
        %1161 = vmatprep.subr.bf16.mxu0 0
        %1162 = vmatpush1.bf16.msra.mxu0 0
        %1163 = vmatprep.subr.bf16.mxu0 0
        %1164 = vmatpush1.bf16.msra.mxu0 0
        %1165 = vmatprep.subr.bf16.mxu0 0
        %1166 = vmatpush1.bf16.msra.mxu0 0
        %1167 = vmatprep.subr.bf16.mxu0 0
        %1168 = vmatpush1.bf16.msra.mxu0 0
        %1169 = vmatprep.subr.bf16.mxu0 0
        %1170 = vmatpush1.bf16.msra.mxu0 0
        %1171 = vmatprep.subr.bf16.mxu0 0
        %1172 = vmatpush1.bf16.msra.mxu0 0
        %1173 = vmatprep.subr.bf16.mxu0 0
        %1174 = vmatpush1.bf16.msra.mxu0 0
        %1175 = vmatprep.subr.bf16.mxu0 0
        %1176 = vmatpush1.bf16.msra.mxu0 0
        %1177 = vmatprep.subr.bf16.mxu0 0
        %1178 = vmatpush1.bf16.msra.mxu0 0
        %1179 = vmatprep.subr.bf16.mxu0 0
        %1180 = vmatpush1.bf16.msra.mxu0 0
        %1181 = vmatprep.subr.bf16.mxu0 0
        %1182 = vmatpush1.bf16.msra.mxu0 0
        %1183 = vmatprep.subr.bf16.mxu0 0
        %1184 = vmatpush1.bf16.msra.mxu0 0
        %1185 = vmatprep.subr.bf16.mxu0 0
        %1186 = vmatpush1.bf16.msra.mxu0 0
        %1187 = vmatprep.mubr.bf16.mxu0 0
        %1188 = vmatmul.mubr.bf16.gmra.mrb[0].mxu0 %v1147
        %v1189 = vpop.f32.mrb[0].mxu0
        %v1190 = vadd.f32 0.0, %v1189
        %v1191 = vpop.f32.mrb[0].mxu0
        %v1192 = vadd.f32 0.0, %v1191
        %v1193 = vpop.f32.mrb[0].mxu0
        %v1194 = vadd.f32 0.0, %v1193
        %v1195 = vpop.f32.mrb[0].mxu0
        %v1196 = vadd.f32 0.0, %v1195
        %1197 = vmatprep.mubr.bf16.mxu0 0
        %1198 = vmatmul.mubr.bf16.gmra.mrb[0].mxu0 %v1150
        %v1199 = vpop.f32.mrb[0].mxu0
        %v1200 = vadd.f32 0.0, %v1199
        %v1201 = vpop.f32.mrb[0].mxu0
        %v1202 = vadd.f32 0.0, %v1201
        %v1203 = vpop.f32.mrb[0].mxu0
        %v1204 = vadd.f32 0.0, %v1203
        %v1205 = vpop.f32.mrb[0].mxu0
        %v1206 = vadd.f32 0.0, %v1205
        %1207 = vmatprep.mubr.bf16.mxu0 0
        %1208 = vmatmul.mubr.bf16.gmra.mrb[0].mxu0 %v1153
        %v1209 = vpop.f32.mrb[0].mxu0
        %v1210 = vadd.f32 0.0, %v1209
        %v1211 = vpop.f32.mrb[0].mxu0
        %v1212 = vadd.f32 0.0, %v1211
        %v1213 = vpop.f32.mrb[0].mxu0
        %v1214 = vadd.f32 0.0, %v1213
        %v1215 = vpop.f32.mrb[0].mxu0
        %v1216 = vadd.f32 0.0, %v1215
        %1217 = vdwg.mxu0
        %v1218 = vmul.f32 %v1214, %v1214
        %v1219 = vmul.f32 %v1216, %v1216
        %v1220 = vmul.f32 %v1190, %v1190
        %v1221 = vmul.f32 %v1192, %v1192
        %v1222 = vmul.f32 %v1194, %v1194
        %v1223 = vmul.f32 %v1196, %v1196
        %v1224 = vmul.f32 %v1200, %v1200
        %v1225 = vmul.f32 %v1202, %v1202
        %v1226 = vmul.f32 %v1204, %v1204
        %v1227 = vmul.f32 %v1206, %v1206
        %v1228 = vmul.f32 %v1210, %v1210
        %v1229 = vmul.f32 %v1212, %v1212
        %v1230 = vadd.f32 %v1220, %v1222
        %v1231 = vadd.f32 %v1230, %v1224
        %v1232 = vadd.f32 %v1231, %v1226
        %v1233 = vadd.f32 %v1232, %v1228
        %v1234 = vadd.f32 %v1233, %v1218
        %v1235 = vrot.slane %v1234, 4
        %v1236 = vadd.f32 %v1234, %v1235
        %v1237 = vrot.slane %v1236, 2
        %v1238 = vadd.f32 %v1236, %v1237
        %v1239 = vrot.slane %v1238, 1
        %v1240 = vadd.f32 %v1238, %v1239
        %v1241 = vadd.f32 %v1221, %v1223
        %v1242 = vadd.f32 %v1241, %v1225
        %v1243 = vadd.f32 %v1242, %v1227
        %v1244 = vadd.f32 %v1243, %v1229
        %v1245 = vadd.f32 %v1244, %v1219
        %v1246 = vrot.slane %v1245, 4
        %v1247 = vadd.f32 %v1245, %v1246
        %v1248 = vrot.slane %v1247, 2
        %v1249 = vadd.f32 %v1247, %v1248
        %v1250 = vrot.slane %v1249, 1
        %v1251 = vadd.f32 %v1249, %v1250
        %v1252 = vsub.f32 %v1240, %v1218
        %v1253 = vsub.f32 %v1251, %v1219
        %v1254 = vmul.f32 %v1252, 0.25
        %v1255 = vmul.f32 %v1253, 0.25
        %v1256 = vsub.f32 %v1254, %v1218
        %v1257 = vsub.f32 %v1255, %v1219
        %v1258 = vlaneseq
        %v1259 = vshrl.u32 %v1258, 7
        %v1260 = vsub.s32 7, %v1259
        %v1261 = vrot.slane %v1214, %v1260
        %v1262 = vlaneseq
        %v1263 = vshrl.u32 %v1262, 7
        %v1264 = vsub.s32 7, %v1263
        %v1265 = vrot.slane %v1216, %v1264
        %v1266 = vsub.f32 %v1190, %v1261
        %v1267 = vsub.f32 %v1192, %v1265
        %v1268 = vadd.f32 %v1256, 1e-05
        %v1269 = vadd.f32 %v1257, 1e-05
        %v1270 = vrsqrt.pop %v1268
        %v1271 = vrsqrt.pop %v1269
        %v1272 = vlaneseq
        %v1273 = vshrl.u32 %v1272, 7
        %v1274 = vsub.s32 7, %v1273
        %v1275 = vrot.slane %v1270, %v1274
        %v1276 = vlaneseq
        %v1277 = vshrl.u32 %v1276, 7
        %v1278 = vsub.s32 7, %v1277
        %v1279 = vrot.slane %v1271, %v1278
        %v1280 = vmul.f32 %v1266, %v1275
        %v1281 = vmul.f32 %v1267, %v1279
        %s1282 = scalar_lea.vmem %s3, 144
        %v1283 = vld [vmem:[%s1282] sm:$0xff]
        %1285 = vset.pattern.permute.xlu0 0
        %1286 = vperm.xlu0 %1285, %v1283
        %v1287 = vpop.permute.xlu0 %1286
        %v1289 = vmul.f32 %v1280, %v1287
        %v1290 = vmul.f32 %v1281, %v1287
        %s1291 = scalar_lea.vmem %s4, 144
        %v1292 = vld [vmem:[%s1291] sm:$0xff]
        %1294 = vset.pattern.permute.xlu0 0
        %1295 = vperm.xlu0 %1294, %v1292
        %v1296 = vpop.permute.xlu0 %1295
        %v1298 = vadd.f32 %v1289, %v1296
        %v1299 = vadd.f32 %v1290, %v1296
        %v1300 = vmax.f32 %v1298, 0.0
        %v1301 = vmax.f32 %v1299, 0.0
        %v1304 = vcombine.low %v1300, %v1301
        %1306 = vst [vmem:[%s218] sm:$0xff] %v1304
        %s1307 = sand.u32 %s137, 1
        %s1308 = scalar_lea.sflag [#allocation3], %s1307
        %s1309 = sand.u32 %s137, 1
        %s1310 = smul.addr %s1309, 8
        %s1311 = scalar_lea.vmem [#allocation2], %s1310
        // Predicated region
        $region41: #{_fcblock_forward.1} parent=39 // pred_check
          %p1312 = pneg %p147
        $region42: #{_fcblock_forward.1} parent=39 // pred_check_branch
          %1314 = sbr.rel (%p1312) target = $region44
        $region43: #{_fcblock_forward.1} parent=39 // pred_region
          %s1315 = smul.u32 2, %s19
          %s1317 = ssub.s32 128, 128
          %1318 = vsyncadd %s1308, %s1317
          %s1319 = smul.addr %s1315, 64
          %s1320 = scalar_lea.hbm %s5, %s1319
          %s1322 = sshll.u32 %s1311, 4
          %s1323 = int_to_ptr.vmem [resolvable:$true] %s1322
          %1325 = dma.vmem_to_hbm [thread:$0]  %s1323, 128, %s1320, %s1308
        $region44: #{_fcblock_forward.1} parent=39 // pred_fallthru
          _
      $region40: #{_fcblock_forward.1} parent=5 // pred_fallthru
        _
      %p1326 = scmp.le.s32.totalorder 2, %s14
      // Predicated region
      $region45: #{_fcblock_forward.1} parent=5 // pred_check
        %p1327 = pneg %p1326
      $region46: #{_fcblock_forward.1} parent=5 // pred_check_branch
        %1329 = sbr.rel (%p1327) target = $region48
      $region47: #{_fcblock_forward.1} parent=5 // pred_region
        %s1330 = ssub.s32 %s14, 2
        // Predicated region
        $region49: #{_fcblock_forward.1} parent=47 // pred_check
          %p1331 = pneg %p153
        $region50: #{_fcblock_forward.1} parent=47 // pred_check_branch
          %1333 = sbr.rel (%p1331) target = $region52
        $region51: #{_fcblock_forward.1} parent=47 // pred_region
          %s1334 = sand.u32 %s138, 1
          %s1335 = scalar_lea.sflag [#allocation3], %s1334
          %s1336 = sand.u32 %s138, 1
          %s1337 = smul.addr %s1336, 8
          %s1338 = scalar_lea.vmem [#allocation2], %s1337
          %1339 = dma.done %s1335, 128
        $region52: #{_fcblock_forward.1} parent=47 // pred_fallthru
          _
      $region48: #{_fcblock_forward.1} parent=5 // pred_fallthru
        _
    $region6: #{_fcblock_forward.1} parent=1 // loop_footer
      %s18 = sadd.s32 1, %s14
    $region7: #{_fcblock_forward.1} parent=1 // loop_footer_branch
      %13 = sbr.rel target = $region3
    $region8: #{_fcblock_forward.1} parent=1 // loop_exit
      _
    %1340 = vsyncpa [#allocation3], 1
    %s1341 = scalar_lea.sflag [#allocation3], 1
    %1342 = vsyncpa %s1341, 1

</llo_original>
